<compile_context>
chip_gen: v7x
topology: tpu7x:2x2x1
jax: 0.10.0
libtpu: 0.0.40
codegen_flags: <defaults>
</compile_context>

<pallas_src>
import functools
import numpy as np
import jax
import jax.numpy as jnp
from jax import lax
from jax.experimental import pallas as pl
from jax.experimental.pallas import tpu as pltpu


def _conv2_fused_kernel(x_ref, w1_ref, scal_ref, w2_ref, o_ref, ypad_ref, *,
                        Ho, Wo, C):
    """One batch element: (conv s2 + bias + PReLU) -> (conv s1 + bias + PReLU).

    x_ref   : (1, Ho, Wo, K1p) bf16  -- im2col'ed stride-2 patches, K padded to 128
    w1_ref  : (K1p, C) bf16
    scal_ref: (4, C) f32             -- rows: b1, a1, b2, a2
    w2_ref  : (3, 3*C, C) bf16       -- per-kh conv2 weights, (kw, cin) flattened
    o_ref   : (1, Ho, Wo, C) f32
    ypad_ref: (Ho+2, Wo+2, C) bf16 VMEM scratch (zero-padded conv1 activation)
    """
    kin = x_ref.shape[-1]
    b1 = scal_ref[0:1, :]
    a1 = scal_ref[1:2, :]
    b2 = scal_ref[2:3, :]
    a2 = scal_ref[3:4, :]

    # ---- conv1: one MXU matmul (K = 128), f32 accumulation, bias + PReLU ----
    x = x_ref[0].reshape(Ho * Wo, kin)
    y = jnp.dot(x, w1_ref[...], preferred_element_type=jnp.float32)
    y = y + b1
    y = jnp.where(y >= 0.0, y, a1 * y)                      # per-channel PReLU
    y3 = y.astype(jnp.bfloat16).reshape(Ho, Wo, C)

    # ---- write conv1 activation + zero ONLY the halo ring (each element of
    #      ypad is stored exactly once per step; no full-buffer zero pass) ----
    ypad_ref[0:1, :, :] = jnp.zeros((1, Wo + 2, C), jnp.bfloat16)
    ypad_ref[Ho + 1:Ho + 2, :, :] = jnp.zeros((1, Wo + 2, C), jnp.bfloat16)
    ypad_ref[1:Ho + 1, 0:1, :] = jnp.zeros((Ho, 1, C), jnp.bfloat16)
    ypad_ref[1:Ho + 1, Wo + 1:Wo + 2, :] = jnp.zeros((Ho, 1, C), jnp.bfloat16)
    ypad_ref[1:Ho + 1, 1:Wo + 1, :] = y3

    # ---- conv2: kw taps concatenated once for the whole padded-H buffer,
    #      then 3 accumulated K=3*C dots over kh (leading-dim slices are free).
    ycat = jnp.concatenate(
        [ypad_ref[:, 0:Wo, :],
         ypad_ref[:, 1:Wo + 1, :],
         ypad_ref[:, 2:Wo + 2, :]], axis=-1)                # (Ho+2, Wo, 3*C)

    z = jnp.dot(ycat[0:Ho].reshape(Ho * Wo, 3 * C), w2_ref[0],
                preferred_element_type=jnp.float32)
    z = z + jnp.dot(ycat[1:Ho + 1].reshape(Ho * Wo, 3 * C), w2_ref[1],
                    preferred_element_type=jnp.float32)
    z = z + jnp.dot(ycat[2:Ho + 2].reshape(Ho * Wo, 3 * C), w2_ref[2],
                    preferred_element_type=jnp.float32)
    z = z + b2
    z = jnp.where(z >= 0.0, z, a2 * z)                      # per-channel PReLU
    o_ref[0] = z.reshape(Ho, Wo, C).astype(o_ref.dtype)


def conv2_forward(x, params, *, nchw_output=True):
    """x: (B, Cin, H, W) f32 (NCHW like PyTorch).
    Returns (B, Cout, Ho, Wo) f32 (or NHWC if nchw_output=False)."""
    B, Cin, H, W = x.shape
    w1, b1, a1 = params["w1"], params["b1"], params["a1"]
    w2, b2, a2 = params["w2"], params["b2"], params["a2"]
    Cout = w1.shape[-1]
    Ho = (H + 2 - 3) // 2 + 1
    Wo = (W + 2 - 3) // 2 + 1

    # NCHW -> NHWC (channels on the 128-lane axis) and wrapper-side im2col of
    # the stride-2 conv (9 shifted strided views, concatenated on channels).
    xn = jnp.transpose(x, (0, 2, 3, 1))
    xp = jnp.pad(xn, ((0, 0), (1, 1), (1, 1), (0, 0)))
    patches = []
    for kh in range(3):
        for kw in range(3):
            patches.append(xp[:, kh:kh + 2 * Ho - 1:2, kw:kw + 2 * Wo - 1:2, :])
    x_im = jnp.concatenate(patches, axis=-1).astype(jnp.bfloat16)  # (B,Ho,Wo,9*Cin)

    # Pad conv1's contraction dim to a lane-dense multiple of 128.
    K1 = 9 * Cin
    K1p = ((K1 + 127) // 128) * 128
    w1f = w1.reshape(K1, Cout).astype(jnp.bfloat16)         # (kh,kw,cin) ordering
    if K1p > K1:
        x_im = jnp.pad(x_im, ((0, 0), (0, 0), (0, 0), (0, K1p - K1)))
        w1f = jnp.pad(w1f, ((0, K1p - K1), (0, 0)))

    w2f = w2.reshape(3, 3 * Cout, Cout).astype(jnp.bfloat16)  # per-kh, (kw,cin) rows
    scal = jnp.stack([b1, a1, b2, a2]).astype(jnp.float32)     # (4, Cout)

    kern = functools.partial(_conv2_fused_kernel, Ho=Ho, Wo=Wo, C=Cout)
    out = pl.pallas_call(
        kern,
        out_shape=jax.ShapeDtypeStruct((B, Ho, Wo, Cout), jnp.float32),
        grid=(B,),
        in_specs=[
            pl.BlockSpec((1, Ho, Wo, K1p), lambda bi: (bi, 0, 0, 0)),
            pl.BlockSpec((K1p, Cout), lambda bi: (0, 0)),
            pl.BlockSpec((4, Cout), lambda bi: (0, 0)),
            pl.BlockSpec((3, 3 * Cout, Cout), lambda bi: (0, 0, 0)),
        ],
        out_specs=pl.BlockSpec((1, Ho, Wo, Cout), lambda bi: (bi, 0, 0, 0)),
        scratch_shapes=[pltpu.VMEM((Ho + 2, Wo + 2, Cout), jnp.bfloat16)],
        compiler_params=pltpu.CompilerParams(
            dimension_semantics=("parallel",)),
    )(x_im, w1f, scal, w2f)

    if nchw_output:
        return jnp.transpose(out, (0, 3, 1, 2))             # back to NCHW
    return out                                               # NHWC (no transpose)


# --------------------------------------------------------------------------
# Parameter init (deterministic, synthetic) and pure-JAX f32 reference
# --------------------------------------------------------------------------
def conv2_init(key, in_planes, out_planes):
    k1, k2, k3, k4 = jax.random.split(key, 4)

    def _cw(k, cin, cout):
        fan_in = 9 * cin
        return jax.random.normal(k, (3, 3, cin, cout), jnp.float32) / np.sqrt(fan_in)

    return {
        "w1": _cw(k1, in_planes, out_planes),
        "b1": jax.random.normal(k2, (out_planes,), jnp.float32) * 0.01,
        "a1": jnp.full((out_planes,), 0.25, jnp.float32),    # PReLU default init
        "w2": _cw(k3, out_planes, out_planes),
        "b2": jax.random.normal(k4, (out_planes,), jnp.float32) * 0.01,
        "a2": jnp.full((out_planes,), 0.25, jnp.float32),
    }


def conv2_reference(x, params):
    """Pure-JAX f32 reference of the PyTorch Conv2 forward (validation only)."""
    xn = jnp.transpose(x, (0, 2, 3, 1))

    def convp(v, w, b, a, stride):
        y = lax.conv_general_dilated(
            v, w, window_strides=(stride, stride), padding=((1, 1), (1, 1)),
            dimension_numbers=("NHWC", "HWIO", "NHWC"))
        y = y + b[None, None, None, :]
        return jnp.where(y >= 0.0, y, a[None, None, None, :] * y)

    y = convp(xn, params["w1"], params["b1"], params["a1"], 2)
    z = convp(y, params["w2"], params["b2"], params["a2"], 1)
    return jnp.transpose(z, (0, 3, 1, 2))


# --------------------------------------------------------------------------
if __name__ == "__main__":
    key = jax.random.PRNGKey(0)
    kp, kx = jax.random.split(key)
    B, Cin, H, W = 2, 4, 16, 16
    Cout = 128            # lane-dense output channels (multiple of 128)

    params = conv2_init(kp, Cin, Cout)
    x = jax.random.uniform(kx, (B, Cin, H, W), jnp.float32)

    out = jax.jit(conv2_forward)(x, params)
    jax.block_until_ready(out)

    assert out.shape == (B, Cout, H // 2, W // 2), out.shape
    ref = conv2_reference(x, params)
    np.testing.assert_allclose(np.asarray(out), np.asarray(ref),
                               rtol=5e-2, atol=5e-2)   # bf16 compute tolerance
    print("KERNEL_OK")
</pallas_src>

<mosaic_0001>
module attributes {stable_mosaic.version = 11 : i64} {
  func.func @_conv2_fused_kernel(%arg0: i32, %arg1: memref<1x8x8x128xbf16, #tpu.memory_space<vmem>>, %arg2: memref<128x128xbf16, #tpu.memory_space<vmem>>, %arg3: memref<4x128xf32, #tpu.memory_space<vmem>>, %arg4: memref<3x384x128xbf16, #tpu.memory_space<vmem>>, %arg5: memref<1x8x8x128xf32, #tpu.memory_space<vmem>>, %arg6: memref<10x10x128xbf16, #tpu.memory_space<vmem>>) attributes {dimension_semantics = [#tpu.dimension_semantics<parallel>], iteration_bounds = array<i64: 2>, scalar_prefetch = 0 : i64, scratch_operands = 1 : i64, tpu.core_type = #tpu.core_type<tc>, window_params = [{transform_indices = @transform_0, window_bounds = array<i64: 1, 8, 8, 128>}, {pipeline_mode = #tpu.pipeline_mode<synchronous>, transform_indices = @transform_1, window_bounds = array<i64: 128, 128>}, {pipeline_mode = #tpu.pipeline_mode<synchronous>, transform_indices = @transform_2, window_bounds = array<i64: 4, 128>}, {pipeline_mode = #tpu.pipeline_mode<synchronous>, transform_indices = @transform_3, window_bounds = array<i64: 3, 384, 128>}, {transform_indices = @transform_4, window_bounds = array<i64: 1, 8, 8, 128>}]} {
    %c0 = arith.constant 0 : index
    %c0_0 = arith.constant 0 : index
    %0 = vector.load %arg3[%c0, %c0_0] : memref<4x128xf32, #tpu.memory_space<vmem>>, vector<1x128xf32>
    %c1 = arith.constant 1 : index
    %c0_1 = arith.constant 0 : index
    %1 = vector.load %arg3[%c1, %c0_1] : memref<4x128xf32, #tpu.memory_space<vmem>>, vector<1x128xf32>
    %c2 = arith.constant 2 : index
    %c0_2 = arith.constant 0 : index
    %2 = vector.load %arg3[%c2, %c0_2] : memref<4x128xf32, #tpu.memory_space<vmem>>, vector<1x128xf32>
    %c3 = arith.constant 3 : index
    %c0_3 = arith.constant 0 : index
    %3 = vector.load %arg3[%c3, %c0_3] : memref<4x128xf32, #tpu.memory_space<vmem>>, vector<1x128xf32>
    %c0_4 = arith.constant 0 : index
    %c0_5 = arith.constant 0 : index
    %c0_6 = arith.constant 0 : index
    %c0_7 = arith.constant 0 : index
    %4 = vector.load %arg1[%c0_4, %c0_5, %c0_6, %c0_7] : memref<1x8x8x128xbf16, #tpu.memory_space<vmem>>, vector<1x8x8x128xbf16>
    %5 = vector.shape_cast %4 : vector<1x8x8x128xbf16> to vector<8x8x128xbf16>
    %6 = vector.shape_cast %5 : vector<8x8x128xbf16> to vector<64x128xbf16>
    %c0_8 = arith.constant 0 : index
    %c0_9 = arith.constant 0 : index
    %7 = vector.load %arg2[%c0_8, %c0_9] : memref<128x128xbf16, #tpu.memory_space<vmem>>, vector<128x128xbf16>
    %cst = arith.constant dense<0.000000e+00> : vector<64x128xf32>
    %8 = tpu.matmul %6, %7, %cst {dimension_numbers = #tpu.dot_dimension_numbers<[1], [0], [0], [1], [0, 0, 1, 1], [], []>} : vector<64x128xbf16>, vector<128x128xbf16>, vector<64x128xf32> -> vector<64x128xf32>
    %9 = vector.broadcast %0 : vector<1x128xf32> to vector<64x128xf32>
    %10 = arith.addf %8, %9 : vector<64x128xf32>
    %cst_10 = arith.constant 0.000000e+00 : f32
    %11 = vector.broadcast %cst_10 : f32 to vector<64x128xf32>
    %12 = arith.cmpf oge, %10, %11 : vector<64x128xf32>
    %13 = vector.broadcast %1 : vector<1x128xf32> to vector<64x128xf32>
    %14 = arith.mulf %13, %10 : vector<64x128xf32>
    %15 = arith.select %12, %10, %14 : vector<64x128xi1>, vector<64x128xf32>
    %16 = arith.truncf %15 : vector<64x128xf32> to vector<64x128xbf16>
    %17 = vector.shape_cast %16 : vector<64x128xbf16> to vector<8x8x128xbf16>
    %cst_11 = arith.constant 0.000000e+00 : bf16
    %18 = vector.broadcast %cst_11 : bf16 to vector<1x10x128xbf16>
    %c0_12 = arith.constant 0 : index
    %c0_13 = arith.constant 0 : index
    %c0_14 = arith.constant 0 : index
    %19 = vector.load %arg6[%c0_12, %c0_13, %c0_14] : memref<10x10x128xbf16, #tpu.memory_space<vmem>>, vector<1x10x128xbf16>
    tpu.vector_store %arg6[%c0_12, %c0_13, %c0_14], %18 {strides = array<i32>} : memref<10x10x128xbf16, #tpu.memory_space<vmem>>, vector<1x10x128xbf16>,
    %cst_15 = arith.constant 0.000000e+00 : bf16
    %20 = vector.broadcast %cst_15 : bf16 to vector<1x10x128xbf16>
    %c9 = arith.constant 9 : index
    %c0_16 = arith.constant 0 : index
    %c0_17 = arith.constant 0 : index
    %21 = vector.load %arg6[%c9, %c0_16, %c0_17] : memref<10x10x128xbf16, #tpu.memory_space<vmem>>, vector<1x10x128xbf16>
    tpu.vector_store %arg6[%c9, %c0_16, %c0_17], %20 {strides = array<i32>} : memref<10x10x128xbf16, #tpu.memory_space<vmem>>, vector<1x10x128xbf16>,
    %cst_18 = arith.constant 0.000000e+00 : bf16
    %22 = vector.broadcast %cst_18 : bf16 to vector<8x1x128xbf16>
    %c1_19 = arith.constant 1 : index
    %c0_20 = arith.constant 0 : index
    %c0_21 = arith.constant 0 : index
    %23 = vector.load %arg6[%c1_19, %c0_20, %c0_21] : memref<10x10x128xbf16, #tpu.memory_space<vmem>>, vector<8x1x128xbf16>
    tpu.vector_store %arg6[%c1_19, %c0_20, %c0_21], %22 {strides = array<i32>} : memref<10x10x128xbf16, #tpu.memory_space<vmem>>, vector<8x1x128xbf16>,
    %cst_22 = arith.constant 0.000000e+00 : bf16
    %24 = vector.broadcast %cst_22 : bf16 to vector<8x1x128xbf16>
    %c1_23 = arith.constant 1 : index
    %c9_24 = arith.constant 9 : index
    %c0_25 = arith.constant 0 : index
    %25 = vector.load %arg6[%c1_23, %c9_24, %c0_25] : memref<10x10x128xbf16, #tpu.memory_space<vmem>>, vector<8x1x128xbf16>
    tpu.vector_store %arg6[%c1_23, %c9_24, %c0_25], %24 {strides = array<i32>} : memref<10x10x128xbf16, #tpu.memory_space<vmem>>, vector<8x1x128xbf16>,
    %c1_26 = arith.constant 1 : index
    %c1_27 = arith.constant 1 : index
    %c0_28 = arith.constant 0 : index
    %26 = vector.load %arg6[%c1_26, %c1_27, %c0_28] : memref<10x10x128xbf16, #tpu.memory_space<vmem>>, vector<8x8x128xbf16>
    tpu.vector_store %arg6[%c1_26, %c1_27, %c0_28], %17 {strides = array<i32>} : memref<10x10x128xbf16, #tpu.memory_space<vmem>>, vector<8x8x128xbf16>,
    %c0_29 = arith.constant 0 : index
    %c0_30 = arith.constant 0 : index
    %c0_31 = arith.constant 0 : index
    %27 = vector.load %arg6[%c0_29, %c0_30, %c0_31] : memref<10x10x128xbf16, #tpu.memory_space<vmem>>, vector<10x8x128xbf16>
    %c0_32 = arith.constant 0 : index
    %c1_33 = arith.constant 1 : index
    %c0_34 = arith.constant 0 : index
    %28 = vector.load %arg6[%c0_32, %c1_33, %c0_34] : memref<10x10x128xbf16, #tpu.memory_space<vmem>>, vector<10x8x128xbf16>
    %c0_35 = arith.constant 0 : index
    %c2_36 = arith.constant 2 : index
    %c0_37 = arith.constant 0 : index
    %29 = vector.load %arg6[%c0_35, %c2_36, %c0_37] : memref<10x10x128xbf16, #tpu.memory_space<vmem>>, vector<10x8x128xbf16>
    %30 = tpu.concatenate %27, %28, %29 in 2 : vector<10x8x128xbf16>, vector<10x8x128xbf16>, vector<10x8x128xbf16> -> vector<10x8x384xbf16>
    %31 = vector.extract_strided_slice %30 {offsets = [0, 0, 0], sizes = [8, 8, 384], strides = [1, 1, 1]} : vector<10x8x384xbf16> to vector<8x8x384xbf16>
    %32 = vector.shape_cast %31 : vector<8x8x384xbf16> to vector<64x384xbf16>
    %c0_38 = arith.constant 0 : index
    %c0_39 = arith.constant 0 : index
    %c0_40 = arith.constant 0 : index
    %33 = vector.load %arg4[%c0_38, %c0_39, %c0_40] : memref<3x384x128xbf16, #tpu.memory_space<vmem>>, vector<1x384x128xbf16>
    %34 = vector.shape_cast %33 : vector<1x384x128xbf16> to vector<384x128xbf16>
    %cst_41 = arith.constant dense<0.000000e+00> : vector<64x128xf32>
    %35 = tpu.matmul %32, %34, %cst_41 {dimension_numbers = #tpu.dot_dimension_numbers<[1], [0], [0], [1], [0, 0, 1, 1], [], []>} : vector<64x384xbf16>, vector<384x128xbf16>, vector<64x128xf32> -> vector<64x128xf32>
    %36 = vector.extract_strided_slice %30 {offsets = [1, 0, 0], sizes = [8, 8, 384], strides = [1, 1, 1]} : vector<10x8x384xbf16> to vector<8x8x384xbf16>
    %37 = vector.shape_cast %36 : vector<8x8x384xbf16> to vector<64x384xbf16>
    %c1_42 = arith.constant 1 : index
    %c0_43 = arith.constant 0 : index
    %c0_44 = arith.constant 0 : index
    %38 = vector.load %arg4[%c1_42, %c0_43, %c0_44] : memref<3x384x128xbf16, #tpu.memory_space<vmem>>, vector<1x384x128xbf16>
    %39 = vector.shape_cast %38 : vector<1x384x128xbf16> to vector<384x128xbf16>
    %cst_45 = arith.constant dense<0.000000e+00> : vector<64x128xf32>
    %40 = tpu.matmul %37, %39, %cst_45 {dimension_numbers = #tpu.dot_dimension_numbers<[1], [0], [0], [1], [0, 0, 1, 1], [], []>} : vector<64x384xbf16>, vector<384x128xbf16>, vector<64x128xf32> -> vector<64x128xf32>
    %41 = arith.addf %35, %40 : vector<64x128xf32>
    %42 = vector.extract_strided_slice %30 {offsets = [2, 0, 0], sizes = [8, 8, 384], strides = [1, 1, 1]} : vector<10x8x384xbf16> to vector<8x8x384xbf16>
    %43 = vector.shape_cast %42 : vector<8x8x384xbf16> to vector<64x384xbf16>
    %c2_46 = arith.constant 2 : index
    %c0_47 = arith.constant 0 : index
    %c0_48 = arith.constant 0 : index
    %44 = vector.load %arg4[%c2_46, %c0_47, %c0_48] : memref<3x384x128xbf16, #tpu.memory_space<vmem>>, vector<1x384x128xbf16>
    %45 = vector.shape_cast %44 : vector<1x384x128xbf16> to vector<384x128xbf16>
    %cst_49 = arith.constant dense<0.000000e+00> : vector<64x128xf32>
    %46 = tpu.matmul %43, %45, %cst_49 {dimension_numbers = #tpu.dot_dimension_numbers<[1], [0], [0], [1], [0, 0, 1, 1], [], []>} : vector<64x384xbf16>, vector<384x128xbf16>, vector<64x128xf32> -> vector<64x128xf32>
    %47 = arith.addf %41, %46 : vector<64x128xf32>
    %48 = vector.broadcast %2 : vector<1x128xf32> to vector<64x128xf32>
    %49 = arith.addf %47, %48 : vector<64x128xf32>
    %cst_50 = arith.constant 0.000000e+00 : f32
    %50 = vector.broadcast %cst_50 : f32 to vector<64x128xf32>
    %51 = arith.cmpf oge, %49, %50 : vector<64x128xf32>
    %52 = vector.broadcast %3 : vector<1x128xf32> to vector<64x128xf32>
    %53 = arith.mulf %52, %49 : vector<64x128xf32>
    %54 = arith.select %51, %49, %53 : vector<64x128xi1>, vector<64x128xf32>
    %55 = vector.shape_cast %54 : vector<64x128xf32> to vector<8x8x128xf32>
    %c0_51 = arith.constant 0 : index
    %c0_52 = arith.constant 0 : index
    %c0_53 = arith.constant 0 : index
    %c0_54 = arith.constant 0 : index
    %56 = vector.load %arg5[%c0_51, %c0_52, %c0_53, %c0_54] : memref<1x8x8x128xf32, #tpu.memory_space<vmem>>, vector<1x8x8x128xf32>
    %57 = vector.shape_cast %56 : vector<1x8x8x128xf32> to vector<8x8x128xf32>
    %58 = vector.shape_cast %55 : vector<8x8x128xf32> to vector<1x8x8x128xf32>
    tpu.vector_store %arg5[%c0_51, %c0_52, %c0_53, %c0_54], %58 {strides = array<i32>} : memref<1x8x8x128xf32, #tpu.memory_space<vmem>>, vector<1x8x8x128xf32>,
    return
  }
  func.func @transform_0(%arg0: i32) -> (i32, i32, i32, i32) {
    %c0_i32 = arith.constant 0 : i32
    %c0_i32_0 = arith.constant 0 : i32
    %c0_i32_1 = arith.constant 0 : i32
    %c0_i32_2 = arith.constant 0 : i32
    return %arg0, %c0_i32, %c0_i32_0, %c0_i32_1 : i32, i32, i32, i32
  }
  func.func @transform_1(%arg0: i32) -> (i32, i32) {
    %c0_i32 = arith.constant 0 : i32
    %c0_i32_0 = arith.constant 0 : i32
    %c0_i32_1 = arith.constant 0 : i32
    return %c0_i32, %c0_i32_0 : i32, i32
  }
  func.func @transform_2(%arg0: i32) -> (i32, i32) {
    %c0_i32 = arith.constant 0 : i32
    %c0_i32_0 = arith.constant 0 : i32
    %c0_i32_1 = arith.constant 0 : i32
    return %c0_i32, %c0_i32_0 : i32, i32
  }
  func.func @transform_3(%arg0: i32) -> (i32, i32, i32) {
    %c0_i32 = arith.constant 0 : i32
    %c0_i32_0 = arith.constant 0 : i32
    %c0_i32_1 = arith.constant 0 : i32
    %c0_i32_2 = arith.constant 0 : i32
    return %c0_i32, %c0_i32_0, %c0_i32_1 : i32, i32, i32
  }
  func.func @transform_4(%arg0: i32) -> (i32, i32, i32, i32) {
    %c0_i32 = arith.constant 0 : i32
    %c0_i32_0 = arith.constant 0 : i32
    %c0_i32_1 = arith.constant 0 : i32
    %c0_i32_2 = arith.constant 0 : i32
    return %arg0, %c0_i32, %c0_i32_0, %c0_i32_1 : i32, i32, i32, i32
  }
}

</mosaic_0001>

<llo_original>
// kernel: conv2_forward.1
$region0: #{conv2_forward.1}
  #allocation0 [shape = 'u32[]', space=smem, size = 0x4, offset = 0x4, fixed_abs, tag = 'smem constant byte address 0x4 - core index']
  #allocation1 [shape = 'u32[144,128]{1,0:T(1,128)}', space=vmem, size = 0x12000, scoped, tag = 'internal scratch']
  #allocation2 [shape = 'bf16[10,10,128]{2,1,0:T(8,128)(2,1)}', space=vmem, size = 0xa000, scoped, tag = 'scratch operand']
  %s0 = inlined_call_operand.vmem [shape: bf16[2,8,8,128], index: 0, kind: input, shape index: {}]
  %s1 = inlined_call_operand.vmem [shape: bf16[128,128], index: 1, kind: input, shape index: {}]
  %s2 = inlined_call_operand.vmem [shape: f32[4,128], index: 2, kind: input, shape index: {}]
  %s3 = inlined_call_operand.vmem [shape: bf16[3,384,128], index: 3, kind: input, shape index: {}]
  %s4 = inlined_call_operand.hbm [shape: f32[2,8,8,128], index: 4, kind: output, shape index: {}]
  %s5 = sld [smem:[#allocation0]]
  $region49: #{conv2_forward.1} parent=0
    _
  %s7 = ssub.s32 1, %s5
  %s8 = scalar_select 0, %s7, %s5
  $region1: #{conv2_forward.1} parent=0
    #allocation3 [shape = 'u8[65536]{0}', space=vmem, size = 0x10000, scoped, tag = 'output window, operand 0']
    #allocation4 [shape = 's32[2]{0}', space=sflag, size = 0x8, scoped, tag = 'scoped memory for conv2_forward.1']
    %9 = vsyncpa [#allocation4], 0
    %s10 = scalar_lea.sflag [#allocation4], 1
    %11 = vsyncpa %s10, 0
    loop: start=0, step=1, limit=4
    $region2: #{conv2_forward.1} parent=1 // loop_pre_header
      _
    $region3: #{conv2_forward.1} parent=1 // loop_header
      %s13 = sphi 0, %s17
      %p14 = scmp.ge.s32.totalorder %s13, 4
      %s23 = sphi 0, %s25
      %s26 = sphi 0, %s23
      %s27 = sphi 0, %s26
      %s43 = sphi 0, %s27
      %s47 = sphi 0, %s47
      %s49 = sphi 0, %s47
      %s50 = sphi 0, %s49
      %s64 = sphi 0, %s50
      %s68 = sphi 0, %s68
      %s70 = sphi 0, %s68
      %s71 = sphi 0, %s70
      %s85 = sphi 0, %s71
      %s89 = sphi 0, %s89
      %s91 = sphi 0, %s89
      %s92 = sphi 0, %s91
      %s106 = sphi 0, %s92
      %s112 = sphi 0, %s114
      %s115 = sphi 0, %s112
      %s116 = sphi 0, %s115
      %s132 = sphi 0, %s116
    $region4: #{conv2_forward.1} parent=1 // loop_header_branch
      %16 = sbr.rel (%p14) target = $region8
    $region5: #{conv2_forward.1} parent=1 // loop_body
      %s18 = ssub.s32 %s13, 1
      %s19 = ssub.s32 %s13, 2
      %s20 = sadd.s32 %s13, 1
      %s21 = ssub.s32 %s13, %s20
      %p22 = scmp.eq.s32.totalorder %s21, 0
      %s24 = sadd.s32 %s23, 1
      %s25 = scalar_select %p22, %s23, %s24
      %p28 = pneg %p22
      %p29 = scmp.eq.s32.totalorder %s13, 1
      %p30 = por %p28, %p29
      %p31 = scmp.ne.s32.totalorder %s23, %s26
      %p32 = scmp.eq.s32.totalorder %s13, 0
      %p33 = por %p31, %p32
      %p34 = scmp.ne.s32.totalorder %s23, %s26
      %p35 = scmp.eq.s32.totalorder %s18, 1
      %p36 = por %p34, %p35
      %p37 = scmp.ne.s32.totalorder %s26, %s27
      %p38 = scmp.eq.s32.totalorder %s18, 0
      %p39 = por %p37, %p38
      %p40 = scmp.ne.s32.totalorder %s26, %s27
      %p41 = scmp.eq.s32.totalorder %s19, 1
      %p42 = por %p40, %p41
      %p44 = scmp.ne.s32.totalorder %s27, %s43
      %p45 = scmp.eq.s32.totalorder %s19, 0
      %p46 = por %p44, %p45
      %s48 = sadd.s32 %s47, 1
      %p51 = scmp.eq.s32.totalorder %s13, 1
      %p52 = scmp.ne.s32.totalorder %s47, %s49
      %p53 = scmp.eq.s32.totalorder %s13, 0
      %p54 = por %p52, %p53
      %p55 = scmp.ne.s32.totalorder %s47, %s49
      %p56 = scmp.eq.s32.totalorder %s18, 1
      %p57 = por %p55, %p56
      %p58 = scmp.ne.s32.totalorder %s49, %s50
      %p59 = scmp.eq.s32.totalorder %s18, 0
      %p60 = por %p58, %p59
      %p61 = scmp.ne.s32.totalorder %s49, %s50
      %p62 = scmp.eq.s32.totalorder %s19, 1
      %p63 = por %p61, %p62
      %p65 = scmp.ne.s32.totalorder %s50, %s64
      %p66 = scmp.eq.s32.totalorder %s19, 0
      %p67 = por %p65, %p66
      %s69 = sadd.s32 %s68, 1
      %p72 = scmp.eq.s32.totalorder %s13, 1
      %p73 = scmp.ne.s32.totalorder %s68, %s70
      %p74 = scmp.eq.s32.totalorder %s13, 0
      %p75 = por %p73, %p74
      %p76 = scmp.ne.s32.totalorder %s68, %s70
      %p77 = scmp.eq.s32.totalorder %s18, 1
      %p78 = por %p76, %p77
      %p79 = scmp.ne.s32.totalorder %s70, %s71
      %p80 = scmp.eq.s32.totalorder %s18, 0
      %p81 = por %p79, %p80
      %p82 = scmp.ne.s32.totalorder %s70, %s71
      %p83 = scmp.eq.s32.totalorder %s19, 1
      %p84 = por %p82, %p83
      %p86 = scmp.ne.s32.totalorder %s71, %s85
      %p87 = scmp.eq.s32.totalorder %s19, 0
      %p88 = por %p86, %p87
      %s90 = sadd.s32 %s89, 1
      %p93 = scmp.eq.s32.totalorder %s13, 1
      %p94 = scmp.ne.s32.totalorder %s89, %s91
      %p95 = scmp.eq.s32.totalorder %s13, 0
      %p96 = por %p94, %p95
      %p97 = scmp.ne.s32.totalorder %s89, %s91
      %p98 = scmp.eq.s32.totalorder %s18, 1
      %p99 = por %p97, %p98
      %p100 = scmp.ne.s32.totalorder %s91, %s92
      %p101 = scmp.eq.s32.totalorder %s18, 0
      %p102 = por %p100, %p101
      %p103 = scmp.ne.s32.totalorder %s91, %s92
      %p104 = scmp.eq.s32.totalorder %s19, 1
      %p105 = por %p103, %p104
      %p107 = scmp.ne.s32.totalorder %s92, %s106
      %p108 = scmp.eq.s32.totalorder %s19, 0
      %p109 = por %p107, %p108
      %s110 = ssub.s32 %s13, %s20
      %p111 = scmp.eq.s32.totalorder %s110, 0
      %s113 = sadd.s32 %s112, 1
      %s114 = scalar_select %p111, %s112, %s113
      %p117 = pneg %p111
      %p118 = scmp.eq.s32.totalorder %s13, 1
      %p119 = por %p117, %p118
      %p120 = scmp.ne.s32.totalorder %s112, %s115
      %p121 = scmp.eq.s32.totalorder %s13, 0
      %p122 = por %p120, %p121
      %p123 = scmp.ne.s32.totalorder %s112, %s115
      %p124 = scmp.eq.s32.totalorder %s18, 1
      %p125 = por %p123, %p124
      %p126 = scmp.ne.s32.totalorder %s115, %s116
      %p127 = scmp.eq.s32.totalorder %s18, 0
      %p128 = por %p126, %p127
      %p129 = scmp.ne.s32.totalorder %s115, %s116
      %p130 = scmp.eq.s32.totalorder %s19, 1
      %p131 = por %p129, %p130
      %p133 = scmp.ne.s32.totalorder %s116, %s132
      %p134 = scmp.eq.s32.totalorder %s19, 0
      %p135 = por %p133, %p134
      %p136 = scmp.le.s32.totalorder 1, %s13
      %p137 = scmp.lt.s32.totalorder %s13, 3
      %p138 = pnand %p136, %p137
      %p139 = pneg %p138
      // Predicated region
      $region9: #{conv2_forward.1} parent=5 // pred_check
        _
      $region10: #{conv2_forward.1} parent=5 // pred_check_branch
        %141 = sbr.rel (%p138) target = $region12
      $region11: #{conv2_forward.1} parent=5 // pred_region
        %s142 = ssub.s32 %s13, 1
        // Predicated region
        $region13: #{conv2_forward.1} parent=11 // pred_check
          %p143 = pneg %p60
        $region14: #{conv2_forward.1} parent=11 // pred_check_branch
          %145 = sbr.rel (%p143) target = $region16
        $region15: #{conv2_forward.1} parent=11 // pred_region
          _
        $region16: #{conv2_forward.1} parent=11 // pred_fallthru
          _
        // Predicated region
        $region17: #{conv2_forward.1} parent=11 // pred_check
          %p146 = pneg %p81
        $region18: #{conv2_forward.1} parent=11 // pred_check_branch
          %148 = sbr.rel (%p146) target = $region20
        $region19: #{conv2_forward.1} parent=11 // pred_region
          _
        $region20: #{conv2_forward.1} parent=11 // pred_fallthru
          _
        // Predicated region
        $region21: #{conv2_forward.1} parent=11 // pred_check
          %p149 = pneg %p102
        $region22: #{conv2_forward.1} parent=11 // pred_check_branch
          %151 = sbr.rel (%p149) target = $region24
        $region23: #{conv2_forward.1} parent=11 // pred_region
          _
        $region24: #{conv2_forward.1} parent=11 // pred_fallthru
          _
      $region12: #{conv2_forward.1} parent=5 // pred_fallthru
        _
      %p152 = scmp.lt.s32.totalorder %s13, 2
      // Predicated region
      $region25: #{conv2_forward.1} parent=5 // pred_check
        %p153 = pneg %p152
      $region26: #{conv2_forward.1} parent=5 // pred_check_branch
        %155 = sbr.rel (%p153) target = $region28
      $region27: #{conv2_forward.1} parent=5 // pred_region
        // Predicated region
        $region29: #{conv2_forward.1} parent=27 // pred_check
          %p156 = pneg %p33
        $region30: #{conv2_forward.1} parent=27 // pred_check_branch
          %158 = sbr.rel (%p156) target = $region32
        $region31: #{conv2_forward.1} parent=27 // pred_region
          %p159 = scmp.lt.s32.totalorder %s13, 1
          %s160 = scalar_select %p159, %s13, 1
          %s161 = smul.addr %s160, 8
          %s162 = smul.addr %s161, 4
          %s163 = scalar_lea.vmem %s0, %s162
        $region32: #{conv2_forward.1} parent=27 // pred_fallthru
          _
      $region28: #{conv2_forward.1} parent=5 // pred_fallthru
        _
      %p164 = scmp.le.s32.totalorder 1, %s13
      %p165 = scmp.lt.s32.totalorder %s13, 3
      %p166 = pnand %p164, %p165
      %p167 = pneg %p166
      // Predicated region
      $region33: #{conv2_forward.1} parent=5 // pred_check
        _
      $region34: #{conv2_forward.1} parent=5 // pred_check_branch
        %169 = sbr.rel (%p166) target = $region36
      $region35: #{conv2_forward.1} parent=5 // pred_region
        %s170 = ssub.s32 %s13, 1
        %p171 = scmp.lt.s32.totalorder %s18, 1
        %s172 = scalar_select %p171, %s18, 1
        %s173 = smul.addr %s172, 8
        %s174 = smul.addr %s173, 4
        %s175 = scalar_lea.vmem %s0, %s174
        %p176 = pneg %p39
        %p177 = pneg %p36
        %p178 = pneg %p60
        %p179 = pneg %p57
        %p180 = pneg %p81
        %p181 = pneg %p78
        %p182 = pneg %p102
        %p183 = pneg %p99
        %p184 = pneg %p128
        %p185 = pneg %p125
        %s186 = sand.u32 %s115, 1
        %s187 = scalar_lea.sflag [#allocation4], %s186
        %s188 = sand.u32 %s115, 1
        %s189 = smul.addr %s188, 64
        %s190 = scalar_lea.vmem [#allocation3], %s189
        %p191 = scmp.lt.s32.totalorder %s18, 1
        %s192 = scalar_select %p191, %s18, 1
        %s193 = smul.addr %s192, 8
        %s194 = smul.addr %s193, 4
        %s195 = scalar_lea.vmem %s0, %s194
        %v197 = vld [vmem:[%s2] sm:$0x1]
        %v198 = vld [vmem:[%s2 + $0x1] sm:$0x1]
        %v199 = vld [vmem:[%s2 + $0x2] sm:$0x1]
        %v200 = vld [vmem:[%s2 + $0x3] sm:$0x1]
        %v201 = vld [vmem:[%s195] sm:$0xf]
        %v202 = vld [vmem:[%s195 + $0x4] sm:$0xf]
        %v203 = vld [vmem:[%s195 + $0x8] sm:$0xf]
        %v204 = vld [vmem:[%s195 + $0xc] sm:$0xf]
        %v205 = vld [vmem:[%s195 + $0x10] sm:$0xf]
        %v206 = vld [vmem:[%s195 + $0x14] sm:$0xf]
        %v207 = vld [vmem:[%s195 + $0x18] sm:$0xf]
        %v208 = vld [vmem:[%s195 + $0x1c] sm:$0xf]
        %v209 = vld [vmem:[%s1] sm:$0xf]
        %v210 = vld [vmem:[%s1 + $0x4] sm:$0xf]
        %v211 = vld [vmem:[%s1 + $0x8] sm:$0xf]
        %v212 = vld [vmem:[%s1 + $0xc] sm:$0xf]
        %v213 = vld [vmem:[%s1 + $0x10] sm:$0xf]
        %v214 = vld [vmem:[%s1 + $0x14] sm:$0xf]
        %v215 = vld [vmem:[%s1 + $0x18] sm:$0xf]
        %v216 = vld [vmem:[%s1 + $0x1c] sm:$0xf]
        %v217 = vld [vmem:[%s1 + $0x20] sm:$0xf]
        %v218 = vld [vmem:[%s1 + $0x24] sm:$0xf]
        %v219 = vld [vmem:[%s1 + $0x28] sm:$0xf]
        %v220 = vld [vmem:[%s1 + $0x2c] sm:$0xf]
        %v221 = vld [vmem:[%s1 + $0x30] sm:$0xf]
        %v222 = vld [vmem:[%s1 + $0x34] sm:$0xf]
        %v223 = vld [vmem:[%s1 + $0x38] sm:$0xf]
        %v224 = vld [vmem:[%s1 + $0x3c] sm:$0xf]
        %v225 = vlaneseq
        %v226 = vshrl.u32 %v225, 7
        %v227 = vsub.s32 0, %v226
        %v228 = vrot.slane %v197, %v227
        %v237 = vunpack.c.l.b16 %v201
        %v238 = vunpack.c.l.b16 %v202
        %v239 = vunpack.c.l.b16 %v203
        %v240 = vunpack.c.l.b16 %v204
        %v241 = vunpack.c.l.b16 %v205
        %v242 = vunpack.c.l.b16 %v206
        %v243 = vunpack.c.l.b16 %v207
        %v244 = vunpack.c.l.b16 %v208
        %v245 = vpack.c.b16 %v238, %v237
        %v246 = vpack.c.b16 %v240, %v239
        %v247 = vpack.c.b16 %v242, %v241
        %v248 = vpack.c.b16 %v244, %v243
        %v269 = vunpack.c.l.b16 %v209
        %v270 = vunpack.c.l.b16 %v210
        %v271 = vunpack.c.l.b16 %v211
        %v272 = vunpack.c.l.b16 %v212
        %v273 = vunpack.c.l.b16 %v213
        %v274 = vunpack.c.l.b16 %v214
        %v275 = vunpack.c.l.b16 %v215
        %v276 = vunpack.c.l.b16 %v216
        %v277 = vunpack.c.l.b16 %v217
        %v278 = vunpack.c.l.b16 %v218
        %v279 = vunpack.c.l.b16 %v219
        %v280 = vunpack.c.l.b16 %v220
        %v281 = vunpack.c.l.b16 %v221
        %v282 = vunpack.c.l.b16 %v222
        %v283 = vunpack.c.l.b16 %v223
        %v284 = vunpack.c.l.b16 %v224
        %v285 = vpack.c.b16 %v270, %v269
        %v286 = vpack.c.b16 %v272, %v271
        %v287 = vpack.c.b16 %v274, %v273
        %v288 = vpack.c.b16 %v276, %v275
        %v289 = vpack.c.b16 %v278, %v277
        %v290 = vpack.c.b16 %v280, %v279
        %v291 = vpack.c.b16 %v282, %v281
        %v292 = vpack.c.b16 %v284, %v283
        %301 = vmatprep.subr.bf16.mxu0 0
        %302 = vmatpush1.bf16.msra.mxu0 %v285
        %303 = vmatprep.subr.bf16.mxu0 0
        %304 = vmatpush1.bf16.msra.mxu0 %v286
        %305 = vmatprep.subr.bf16.mxu0 0
        %306 = vmatpush1.bf16.msra.mxu0 %v287
        %307 = vmatprep.subr.bf16.mxu0 0
        %308 = vmatpush1.bf16.msra.mxu0 %v288
        %309 = vmatprep.subr.bf16.mxu0 0
        %310 = vmatpush1.bf16.msra.mxu0 %v289
        %311 = vmatprep.subr.bf16.mxu0 0
        %312 = vmatpush1.bf16.msra.mxu0 %v290
        %313 = vmatprep.subr.bf16.mxu0 0
        %314 = vmatpush1.bf16.msra.mxu0 %v291
        %315 = vmatprep.subr.bf16.mxu0 0
        %316 = vmatpush1.bf16.msra.mxu0 %v292
        %317 = vmatprep.subr.bf16.mxu0 0
        %318 = vmatpush1.bf16.msra.mxu0 0
        %319 = vmatprep.subr.bf16.mxu0 0
        %320 = vmatpush1.bf16.msra.mxu0 0
        %321 = vmatprep.subr.bf16.mxu0 0
        %322 = vmatpush1.bf16.msra.mxu0 0
        %323 = vmatprep.subr.bf16.mxu0 0
        %324 = vmatpush1.bf16.msra.mxu0 0
        %325 = vmatprep.subr.bf16.mxu0 0
        %326 = vmatpush1.bf16.msra.mxu0 0
        %327 = vmatprep.subr.bf16.mxu0 0
        %328 = vmatpush1.bf16.msra.mxu0 0
        %329 = vmatprep.subr.bf16.mxu0 0
        %330 = vmatpush1.bf16.msra.mxu0 0
        %331 = vmatprep.subr.bf16.mxu0 0
        %332 = vmatpush1.bf16.msra.mxu0 0
        %333 = vmatprep.mubr.bf16.mxu0 0
        %334 = vmatmul.mubr.bf16.gmra.mrb[0].mxu0 %v245
        %v335 = vpop.f32.mrb[0].mxu0
        %v336 = vadd.f32 %v228, %v335
        %v337 = vpop.f32.mrb[0].mxu0
        %v338 = vpop.f32.mrb[0].mxu0
        %v339 = vadd.f32 %v228, %v338
        %v340 = vpop.f32.mrb[0].mxu0
        %341 = vmatprep.mubr.bf16.mxu0 0
        %342 = vmatmul.mubr.bf16.gmra.mrb[0].mxu0 %v246
        %v343 = vpop.f32.mrb[0].mxu0
        %v344 = vadd.f32 %v228, %v343
        %v345 = vpop.f32.mrb[0].mxu0
        %v346 = vpop.f32.mrb[0].mxu0
        %v347 = vadd.f32 %v228, %v346
        %v348 = vpop.f32.mrb[0].mxu0
        %349 = vmatprep.mubr.bf16.mxu0 0
        %350 = vmatmul.mubr.bf16.gmra.mrb[0].mxu0 %v247
        %v351 = vpop.f32.mrb[0].mxu0
        %v352 = vadd.f32 %v228, %v351
        %v353 = vpop.f32.mrb[0].mxu0
        %v354 = vpop.f32.mrb[0].mxu0
        %v355 = vadd.f32 %v228, %v354
        %v356 = vpop.f32.mrb[0].mxu0
        %357 = vmatprep.mubr.bf16.mxu0 0
        %358 = vmatmul.mubr.bf16.gmra.mrb[0].mxu0 %v248
        %v359 = vpop.f32.mrb[0].mxu0
        %v360 = vadd.f32 %v228, %v359
        %v361 = vpop.f32.mrb[0].mxu0
        %v362 = vpop.f32.mrb[0].mxu0
        %v363 = vadd.f32 %v228, %v362
        %v364 = vpop.f32.mrb[0].mxu0
        %365 = vdwg.mxu0
        %vm366 = vcmp.ge.f32.partialorder %v336, 0.0
        %vm367 = vcmp.ge.f32.partialorder %v339, 0.0
        %vm368 = vcmp.ge.f32.partialorder %v344, 0.0
        %vm369 = vcmp.ge.f32.partialorder %v347, 0.0
        %vm370 = vcmp.ge.f32.partialorder %v352, 0.0
        %vm371 = vcmp.ge.f32.partialorder %v355, 0.0
        %vm372 = vcmp.ge.f32.partialorder %v360, 0.0
        %vm373 = vcmp.ge.f32.partialorder %v363, 0.0
        %v374 = vlaneseq
        %v375 = vshrl.u32 %v374, 7
        %v376 = vsub.s32 0, %v375
        %v377 = vrot.slane %v198, %v376
        %v378 = vmul.f32 %v377, %v336
        %v379 = vmul.f32 %v377, %v339
        %v380 = vmul.f32 %v377, %v344
        %v381 = vmul.f32 %v377, %v347
        %v382 = vmul.f32 %v377, %v352
        %v383 = vmul.f32 %v377, %v355
        %v384 = vmul.f32 %v377, %v360
        %v385 = vmul.f32 %v377, %v363
        %v386 = vsel %vm366, %v336, %v378
        %v387 = vsel %vm367, %v339, %v379
        %v388 = vsel %vm368, %v344, %v380
        %v389 = vsel %vm369, %v347, %v381
        %v390 = vsel %vm370, %v352, %v382
        %v391 = vsel %vm371, %v355, %v383
        %v392 = vsel %vm372, %v360, %v384
        %v393 = vsel %vm373, %v363, %v385
        %v394 = vpack.c.bf16 %v387, %v386
        %v395 = vpack.c.bf16 %v389, %v388
        %v396 = vpack.c.bf16 %v391, %v390
        %v397 = vpack.c.bf16 %v393, %v392
        %v402 = vunpack.c.l.b16 %v394
        %v403 = vunpack.c.h.b16 %v394
        %v404 = vunpack.c.l.b16 %v395
        %v405 = vunpack.c.h.b16 %v395
        %v406 = vunpack.c.l.b16 %v396
        %v407 = vunpack.c.h.b16 %v396
        %v408 = vunpack.c.l.b16 %v397
        %v409 = vunpack.c.h.b16 %v397
        %v410 = vpack.c.b16 %v402, %v402
        %v411 = vpack.c.b16 %v403, %v403
        %v412 = vpack.c.b16 %v404, %v404
        %v413 = vpack.c.b16 %v405, %v405
        %v414 = vpack.c.b16 %v406, %v406
        %v415 = vpack.c.b16 %v407, %v407
        %v416 = vpack.c.b16 %v408, %v408
        %v417 = vpack.c.b16 %v409, %v409
        %418 = vst [vmem:[#allocation2] sm:$0xf] 0
        %419 = vst [vmem:[#allocation2 + $0x4] sm:$0x1] 0
        %s420 = scalar_lea.vmem [#allocation2], 72
        %421 = vst [vmem:[%s420] sm:$0xf] 0
        %422 = vst [vmem:[%s420 + $0x4] sm:$0x1] 0
        %s423 = scalar_lea.vmem [#allocation2], 8
        %vm424 = vcmask 1040384
        %vm425 = vsmask.f32 256
        %vm426 = vmand %vm424, %vm425
        %v427 = vld [vmem:[%s423] sm:$0x1]
        %v428 = vsel %vm426, 0, %v427
        %429 = vst [vmem:[%s423] sm:$0x1] %v428
        %v430 = vld [vmem:[%s423 + $0x8] sm:$0x1]
        %v431 = vsel %vm426, 0, %v430
        %432 = vst [vmem:[%s423 + $0x8] sm:$0x1] %v431
        %v433 = vld [vmem:[%s423 + $0x10] sm:$0x1]
        %v434 = vsel %vm426, 0, %v433
        %435 = vst [vmem:[%s423 + $0x10] sm:$0x1] %v434
        %v436 = vld [vmem:[%s423 + $0x18] sm:$0x1]
        %v437 = vsel %vm426, 0, %v436
        %438 = vst [vmem:[%s423 + $0x18] sm:$0x1] %v437
        %v439 = vld [vmem:[%s423 + $0x20] sm:$0x1]
        %v440 = vsel %vm426, 0, %v439
        %441 = vst [vmem:[%s423 + $0x20] sm:$0x1] %v440
        %v442 = vld [vmem:[%s423 + $0x28] sm:$0x1]
        %v443 = vsel %vm426, 0, %v442
        %444 = vst [vmem:[%s423 + $0x28] sm:$0x1] %v443
        %v445 = vld [vmem:[%s423 + $0x30] sm:$0x1]
        %v446 = vsel %vm426, 0, %v445
        %447 = vst [vmem:[%s423 + $0x30] sm:$0x1] %v446
        %v448 = vld [vmem:[%s423 + $0x38] sm:$0x1]
        %v449 = vsel %vm426, 0, %v448
        %450 = vst [vmem:[%s423 + $0x38] sm:$0x1] %v449
        %vm451 = vsmask.f32 7938
        %vm452 = vmand %vm424, %vm451
        %v453 = vld [vmem:[%s423 + $0x4] sm:$0x1]
        %v454 = vsel %vm452, 0, %v453
        %455 = vst [vmem:[%s423 + $0x4] sm:$0x1] %v454
        %v456 = vld [vmem:[%s423 + $0xc] sm:$0x1]
        %v457 = vsel %vm452, 0, %v456
        %458 = vst [vmem:[%s423 + $0xc] sm:$0x1] %v457
        %v459 = vld [vmem:[%s423 + $0x14] sm:$0x1]
        %v460 = vsel %vm452, 0, %v459
        %461 = vst [vmem:[%s423 + $0x14] sm:$0x1] %v460
        %v462 = vld [vmem:[%s423 + $0x1c] sm:$0x1]
        %v463 = vsel %vm452, 0, %v462
        %464 = vst [vmem:[%s423 + $0x1c] sm:$0x1] %v463
        %v465 = vld [vmem:[%s423 + $0x24] sm:$0x1]
        %v466 = vsel %vm452, 0, %v465
        %467 = vst [vmem:[%s423 + $0x24] sm:$0x1] %v466
        %v468 = vld [vmem:[%s423 + $0x2c] sm:$0x1]
        %v469 = vsel %vm452, 0, %v468
        %470 = vst [vmem:[%s423 + $0x2c] sm:$0x1] %v469
        %v471 = vld [vmem:[%s423 + $0x34] sm:$0x1]
        %v472 = vsel %vm452, 0, %v471
        %473 = vst [vmem:[%s423 + $0x34] sm:$0x1] %v472
        %v474 = vld [vmem:[%s423 + $0x3c] sm:$0x1]
        %v475 = vsel %vm452, 0, %v474
        %476 = vst [vmem:[%s423 + $0x3c] sm:$0x1] %v475
        %v478 = vshrl.u32 %v410, 16
        %v480 = vrot.slane %v478, 7
        %v481 = vshll.u32 %v410, 16
        %v483 = vor.u32 %v480, %v481
        %v484 = vrot.slane %v480, 4
        %v486 = vshrl.u32 %v411, 16
        %v488 = vrot.slane %v486, 7
        %v489 = vshll.u32 %v411, 16
        %v491 = vor.u32 %v488, %v489
        %v492 = vrot.slane %v488, 4
        %v494 = vshrl.u32 %v412, 16
        %v496 = vrot.slane %v494, 7
        %v497 = vshll.u32 %v412, 16
        %v499 = vor.u32 %v496, %v497
        %v500 = vrot.slane %v496, 4
        %v502 = vshrl.u32 %v413, 16
        %v504 = vrot.slane %v502, 7
        %v505 = vshll.u32 %v413, 16
        %v507 = vor.u32 %v504, %v505
        %v508 = vrot.slane %v504, 4
        %v510 = vshrl.u32 %v414, 16
        %v512 = vrot.slane %v510, 7
        %v513 = vshll.u32 %v414, 16
        %v515 = vor.u32 %v512, %v513
        %v516 = vrot.slane %v512, 4
        %v518 = vshrl.u32 %v415, 16
        %v520 = vrot.slane %v518, 7
        %v521 = vshll.u32 %v415, 16
        %v523 = vor.u32 %v520, %v521
        %v524 = vrot.slane %v520, 4
        %v526 = vshrl.u32 %v416, 16
        %v528 = vrot.slane %v526, 7
        %v529 = vshll.u32 %v416, 16
        %v531 = vor.u32 %v528, %v529
        %v532 = vrot.slane %v528, 4
        %v534 = vshrl.u32 %v417, 16
        %v536 = vrot.slane %v534, 7
        %v537 = vshll.u32 %v417, 16
        %v539 = vor.u32 %v536, %v537
        %v540 = vrot.slane %v536, 4
        %vm557 = vcmask 1043456
        %vm558 = vmand %vm557, %vm451
        %v559 = vld [vmem:[%s423] sm:$0xf]
        %v560 = vsel %vm558, %v483, %v559
        %561 = vst [vmem:[%s423] sm:$0xf] %v560
        %v562 = vld [vmem:[%s423 + $0x4] sm:$0x1]
        %v563 = vsel %vm426, %v484, %v562
        %564 = vst [vmem:[%s423 + $0x4] sm:$0x1] %v563
        %v565 = vld [vmem:[%s423 + $0x8] sm:$0xf]
        %v566 = vsel %vm558, %v491, %v565
        %567 = vst [vmem:[%s423 + $0x8] sm:$0xf] %v566
        %v568 = vld [vmem:[%s423 + $0xc] sm:$0x1]
        %v569 = vsel %vm426, %v492, %v568
        %570 = vst [vmem:[%s423 + $0xc] sm:$0x1] %v569
        %v571 = vld [vmem:[%s423 + $0x10] sm:$0xf]
        %v572 = vsel %vm558, %v499, %v571
        %573 = vst [vmem:[%s423 + $0x10] sm:$0xf] %v572
        %v574 = vld [vmem:[%s423 + $0x14] sm:$0x1]
        %v575 = vsel %vm426, %v500, %v574
        %576 = vst [vmem:[%s423 + $0x14] sm:$0x1] %v575
        %v577 = vld [vmem:[%s423 + $0x18] sm:$0xf]
        %v578 = vsel %vm558, %v507, %v577
        %579 = vst [vmem:[%s423 + $0x18] sm:$0xf] %v578
        %v580 = vld [vmem:[%s423 + $0x1c] sm:$0x1]
        %v581 = vsel %vm426, %v508, %v580
        %582 = vst [vmem:[%s423 + $0x1c] sm:$0x1] %v581
        %v583 = vld [vmem:[%s423 + $0x20] sm:$0xf]
        %v584 = vsel %vm558, %v515, %v583
        %585 = vst [vmem:[%s423 + $0x20] sm:$0xf] %v584
        %v586 = vld [vmem:[%s423 + $0x24] sm:$0x1]
        %v587 = vsel %vm426, %v516, %v586
        %588 = vst [vmem:[%s423 + $0x24] sm:$0x1] %v587
        %v589 = vld [vmem:[%s423 + $0x28] sm:$0xf]
        %v590 = vsel %vm558, %v523, %v589
        %591 = vst [vmem:[%s423 + $0x28] sm:$0xf] %v590
        %v592 = vld [vmem:[%s423 + $0x2c] sm:$0x1]
        %v593 = vsel %vm426, %v524, %v592
        %594 = vst [vmem:[%s423 + $0x2c] sm:$0x1] %v593
        %v595 = vld [vmem:[%s423 + $0x30] sm:$0xf]
        %v596 = vsel %vm558, %v531, %v595
        %597 = vst [vmem:[%s423 + $0x30] sm:$0xf] %v596
        %v598 = vld [vmem:[%s423 + $0x34] sm:$0x1]
        %v599 = vsel %vm426, %v532, %v598
        %600 = vst [vmem:[%s423 + $0x34] sm:$0x1] %v599
        %v601 = vld [vmem:[%s423 + $0x38] sm:$0xf]
        %v602 = vsel %vm558, %v539, %v601
        %603 = vst [vmem:[%s423 + $0x38] sm:$0xf] %v602
        %v604 = vld [vmem:[%s423 + $0x3c] sm:$0x1]
        %v605 = vsel %vm426, %v540, %v604
        %606 = vst [vmem:[%s423 + $0x3c] sm:$0x1] %v605
        %v607 = vld [vmem:[#allocation2] sm:$0xf]
        %v608 = vld [vmem:[#allocation2 + $0x8] sm:$0xf]
        %v609 = vld [vmem:[#allocation2 + $0x10] sm:$0xf]
        %v610 = vld [vmem:[#allocation2 + $0x18] sm:$0xf]
        %v611 = vld [vmem:[#allocation2 + $0x20] sm:$0xf]
        %v612 = vld [vmem:[#allocation2 + $0x28] sm:$0xf]
        %v613 = vld [vmem:[#allocation2 + $0x30] sm:$0xf]
        %v614 = vld [vmem:[#allocation2 + $0x38] sm:$0xf]
        %v615 = vld [vmem:[#allocation2 + $0x40] sm:$0xf]
        %v616 = vld [vmem:[#allocation2 + $0x48] sm:$0xf]
        %v617 = vld [vmem:[#allocation2 + $0x4] sm:$0x1]
        %v618 = vld [vmem:[#allocation2 + $0xc] sm:$0x1]
        %v619 = vld [vmem:[#allocation2 + $0x14] sm:$0x1]
        %v620 = vld [vmem:[#allocation2 + $0x1c] sm:$0x1]
        %v621 = vld [vmem:[#allocation2 + $0x24] sm:$0x1]
        %v622 = vld [vmem:[#allocation2 + $0x2c] sm:$0x1]
        %v623 = vld [vmem:[#allocation2 + $0x34] sm:$0x1]
        %v624 = vld [vmem:[#allocation2 + $0x3c] sm:$0x1]
        %v625 = vld [vmem:[#allocation2 + $0x44] sm:$0x1]
        %v626 = vld [vmem:[#allocation2 + $0x4c] sm:$0x1]
        %v627 = vld [vmem:[#allocation2] sm:$0xe]
        %v628 = vld [vmem:[#allocation2 + $0x8] sm:$0xe]
        %v629 = vld [vmem:[#allocation2 + $0x10] sm:$0xe]
        %v630 = vld [vmem:[#allocation2 + $0x18] sm:$0xe]
        %v631 = vld [vmem:[#allocation2 + $0x20] sm:$0xe]
        %v632 = vld [vmem:[#allocation2 + $0x28] sm:$0xe]
        %v633 = vld [vmem:[#allocation2 + $0x30] sm:$0xe]
        %v634 = vld [vmem:[#allocation2 + $0x38] sm:$0xe]
        %v635 = vld [vmem:[#allocation2 + $0x40] sm:$0xe]
        %v636 = vld [vmem:[#allocation2 + $0x48] sm:$0xe]
        %v657 = vunpack.c.l.b16 %v607
        %v658 = vunpack.c.l.b16 %v617
        %v659 = vunpack.c.l.b16 %v608
        %v660 = vunpack.c.l.b16 %v618
        %v661 = vunpack.c.l.b16 %v609
        %v662 = vunpack.c.l.b16 %v619
        %v663 = vunpack.c.l.b16 %v610
        %v664 = vunpack.c.l.b16 %v620
        %v665 = vunpack.c.l.b16 %v611
        %v666 = vunpack.c.l.b16 %v621
        %v667 = vunpack.c.l.b16 %v612
        %v668 = vunpack.c.l.b16 %v622
        %v669 = vunpack.c.l.b16 %v613
        %v670 = vunpack.c.l.b16 %v623
        %v671 = vunpack.c.l.b16 %v614
        %v672 = vunpack.c.l.b16 %v624
        %v673 = vunpack.c.l.b16 %v615
        %v674 = vunpack.c.l.b16 %v625
        %v675 = vunpack.c.l.b16 %v616
        %v676 = vunpack.c.l.b16 %v626
        %v677 = vpack.c.b16 %v658, %v657
        %v678 = vpack.c.b16 %v660, %v659
        %v679 = vpack.c.b16 %v662, %v661
        %v680 = vpack.c.b16 %v664, %v663
        %v681 = vpack.c.b16 %v666, %v665
        %v682 = vpack.c.b16 %v668, %v667
        %v683 = vpack.c.b16 %v670, %v669
        %v684 = vpack.c.b16 %v672, %v671
        %v685 = vpack.c.b16 %v674, %v673
        %v686 = vpack.c.b16 %v676, %v675
        %v688 = vshrl.u32 %v677, 16
        %v690 = vshll.u32 %v677, 16
        %v692 = vrot.slane %v690, 1
        %v693 = vor.u32 %v688, %v692
        %v695 = vshrl.u32 %v678, 16
        %v697 = vshll.u32 %v678, 16
        %v699 = vrot.slane %v697, 1
        %v700 = vor.u32 %v695, %v699
        %v702 = vshrl.u32 %v679, 16
        %v704 = vshll.u32 %v679, 16
        %v706 = vrot.slane %v704, 1
        %v707 = vor.u32 %v702, %v706
        %v709 = vshrl.u32 %v680, 16
        %v711 = vshll.u32 %v680, 16
        %v713 = vrot.slane %v711, 1
        %v714 = vor.u32 %v709, %v713
        %v716 = vshrl.u32 %v681, 16
        %v718 = vshll.u32 %v681, 16
        %v720 = vrot.slane %v718, 1
        %v721 = vor.u32 %v716, %v720
        %v723 = vshrl.u32 %v682, 16
        %v725 = vshll.u32 %v682, 16
        %v727 = vrot.slane %v725, 1
        %v728 = vor.u32 %v723, %v727
        %v730 = vshrl.u32 %v683, 16
        %v732 = vshll.u32 %v683, 16
        %v734 = vrot.slane %v732, 1
        %v735 = vor.u32 %v730, %v734
        %v737 = vshrl.u32 %v684, 16
        %v739 = vshll.u32 %v684, 16
        %v741 = vrot.slane %v739, 1
        %v742 = vor.u32 %v737, %v741
        %v744 = vshrl.u32 %v685, 16
        %v746 = vshll.u32 %v685, 16
        %v748 = vrot.slane %v746, 1
        %v749 = vor.u32 %v744, %v748
        %v751 = vshrl.u32 %v686, 16
        %v753 = vshll.u32 %v686, 16
        %v755 = vrot.slane %v753, 1
        %v756 = vor.u32 %v751, %v755
        %v767 = vunpack.c.l.b16 %v627
        %v768 = vunpack.c.l.b16 %v628
        %v769 = vunpack.c.l.b16 %v629
        %v770 = vunpack.c.l.b16 %v630
        %v771 = vunpack.c.l.b16 %v631
        %v772 = vunpack.c.l.b16 %v632
        %v773 = vunpack.c.l.b16 %v633
        %v774 = vunpack.c.l.b16 %v634
        %v775 = vunpack.c.l.b16 %v635
        %v776 = vunpack.c.l.b16 %v636
        %v777 = vpack.c.b16 %v658, %v767
        %v778 = vpack.c.b16 %v660, %v768
        %v779 = vpack.c.b16 %v662, %v769
        %v780 = vpack.c.b16 %v664, %v770
        %v781 = vpack.c.b16 %v666, %v771
        %v782 = vpack.c.b16 %v668, %v772
        %v783 = vpack.c.b16 %v670, %v773
        %v784 = vpack.c.b16 %v672, %v774
        %v785 = vpack.c.b16 %v674, %v775
        %v786 = vpack.c.b16 %v676, %v776
        %v787 = vrot.slane %v777, 1
        %v788 = vrot.slane %v778, 1
        %v789 = vrot.slane %v779, 1
        %v790 = vrot.slane %v780, 1
        %v791 = vrot.slane %v781, 1
        %v792 = vrot.slane %v782, 1
        %v793 = vrot.slane %v783, 1
        %v794 = vrot.slane %v784, 1
        %v795 = vrot.slane %v785, 1
        %v796 = vrot.slane %v786, 1
        %v797 = vunpack.c.l.b16 %v693
        %v798 = vunpack.c.l.b16 %v787
        %v799 = vunpack.c.l.b16 %v700
        %v800 = vunpack.c.l.b16 %v788
        %v801 = vunpack.c.l.b16 %v707
        %v802 = vunpack.c.l.b16 %v789
        %v803 = vunpack.c.l.b16 %v714
        %v804 = vunpack.c.l.b16 %v790
        %v805 = vunpack.c.l.b16 %v721
        %v806 = vunpack.c.l.b16 %v791
        %v807 = vunpack.c.l.b16 %v728
        %v808 = vunpack.c.l.b16 %v792
        %v809 = vunpack.c.l.b16 %v735
        %v810 = vunpack.c.l.b16 %v793
        %v811 = vunpack.c.l.b16 %v742
        %v812 = vunpack.c.l.b16 %v794
        %v813 = vld [vmem:[%s3] sm:$0xf]
        %v814 = vld [vmem:[%s3 + $0x4] sm:$0xf]
        %v815 = vld [vmem:[%s3 + $0x8] sm:$0xf]
        %v816 = vld [vmem:[%s3 + $0xc] sm:$0xf]
        %v817 = vld [vmem:[%s3 + $0x10] sm:$0xf]
        %v818 = vld [vmem:[%s3 + $0x14] sm:$0xf]
        %v819 = vld [vmem:[%s3 + $0x18] sm:$0xf]
        %v820 = vld [vmem:[%s3 + $0x1c] sm:$0xf]
        %v821 = vld [vmem:[%s3 + $0x20] sm:$0xf]
        %v822 = vld [vmem:[%s3 + $0x24] sm:$0xf]
        %v823 = vld [vmem:[%s3 + $0x28] sm:$0xf]
        %v824 = vld [vmem:[%s3 + $0x2c] sm:$0xf]
        %v825 = vld [vmem:[%s3 + $0x30] sm:$0xf]
        %v826 = vld [vmem:[%s3 + $0x34] sm:$0xf]
        %v827 = vld [vmem:[%s3 + $0x38] sm:$0xf]
        %v828 = vld [vmem:[%s3 + $0x3c] sm:$0xf]
        %v829 = vld [vmem:[%s3 + $0x40] sm:$0xf]
        %v830 = vld [vmem:[%s3 + $0x44] sm:$0xf]
        %v831 = vld [vmem:[%s3 + $0x48] sm:$0xf]
        %v832 = vld [vmem:[%s3 + $0x4c] sm:$0xf]
        %v833 = vld [vmem:[%s3 + $0x50] sm:$0xf]
        %v834 = vld [vmem:[%s3 + $0x54] sm:$0xf]
        %v835 = vld [vmem:[%s3 + $0x58] sm:$0xf]
        %v836 = vld [vmem:[%s3 + $0x5c] sm:$0xf]
        %v837 = vld [vmem:[%s3 + $0x60] sm:$0xf]
        %v838 = vld [vmem:[%s3 + $0x64] sm:$0xf]
        %v839 = vld [vmem:[%s3 + $0x68] sm:$0xf]
        %v840 = vld [vmem:[%s3 + $0x6c] sm:$0xf]
        %v841 = vld [vmem:[%s3 + $0x70] sm:$0xf]
        %v842 = vld [vmem:[%s3 + $0x74] sm:$0xf]
        %v843 = vld [vmem:[%s3 + $0x78] sm:$0xf]
        %v844 = vld [vmem:[%s3 + $0x7c] sm:$0xf]
        %v845 = vld [vmem:[%s3 + $0x80] sm:$0xf]
        %v846 = vld [vmem:[%s3 + $0x84] sm:$0xf]
        %v847 = vld [vmem:[%s3 + $0x88] sm:$0xf]
        %v848 = vld [vmem:[%s3 + $0x8c] sm:$0xf]
        %v849 = vld [vmem:[%s3 + $0x90] sm:$0xf]
        %v850 = vld [vmem:[%s3 + $0x94] sm:$0xf]
        %v851 = vld [vmem:[%s3 + $0x98] sm:$0xf]
        %v852 = vld [vmem:[%s3 + $0x9c] sm:$0xf]
        %v853 = vld [vmem:[%s3 + $0xa0] sm:$0xf]
        %v854 = vld [vmem:[%s3 + $0xa4] sm:$0xf]
        %v855 = vld [vmem:[%s3 + $0xa8] sm:$0xf]
        %v856 = vld [vmem:[%s3 + $0xac] sm:$0xf]
        %v857 = vld [vmem:[%s3 + $0xb0] sm:$0xf]
        %v858 = vld [vmem:[%s3 + $0xb4] sm:$0xf]
        %v859 = vld [vmem:[%s3 + $0xb8] sm:$0xf]
        %v860 = vld [vmem:[%s3 + $0xbc] sm:$0xf]
        %v861 = vunpack.c.l.b16 %v749
        %v862 = vunpack.c.l.b16 %v795
        %s863 = scalar_lea.vmem %s3, 192
        %v864 = vld [vmem:[%s863] sm:$0xf]
        %v865 = vld [vmem:[%s863 + $0x4] sm:$0xf]
        %v866 = vld [vmem:[%s863 + $0x8] sm:$0xf]
        %v867 = vld [vmem:[%s863 + $0xc] sm:$0xf]
        %v868 = vld [vmem:[%s863 + $0x10] sm:$0xf]
        %v869 = vld [vmem:[%s863 + $0x14] sm:$0xf]
        %v870 = vld [vmem:[%s863 + $0x18] sm:$0xf]
        %v871 = vld [vmem:[%s863 + $0x1c] sm:$0xf]
        %v872 = vld [vmem:[%s863 + $0x20] sm:$0xf]
        %v873 = vld [vmem:[%s863 + $0x24] sm:$0xf]
        %v874 = vld [vmem:[%s863 + $0x28] sm:$0xf]
        %v875 = vld [vmem:[%s863 + $0x2c] sm:$0xf]
        %v876 = vld [vmem:[%s863 + $0x30] sm:$0xf]
        %v877 = vld [vmem:[%s863 + $0x34] sm:$0xf]
        %v878 = vld [vmem:[%s863 + $0x38] sm:$0xf]
        %v879 = vld [vmem:[%s863 + $0x3c] sm:$0xf]
        %v880 = vld [vmem:[%s863 + $0x40] sm:$0xf]
        %v881 = vld [vmem:[%s863 + $0x44] sm:$0xf]
        %v882 = vld [vmem:[%s863 + $0x48] sm:$0xf]
        %v883 = vld [vmem:[%s863 + $0x4c] sm:$0xf]
        %v884 = vld [vmem:[%s863 + $0x50] sm:$0xf]
        %v885 = vld [vmem:[%s863 + $0x54] sm:$0xf]
        %v886 = vld [vmem:[%s863 + $0x58] sm:$0xf]
        %v887 = vld [vmem:[%s863 + $0x5c] sm:$0xf]
        %v888 = vld [vmem:[%s863 + $0x60] sm:$0xf]
        %v889 = vld [vmem:[%s863 + $0x64] sm:$0xf]
        %v890 = vld [vmem:[%s863 + $0x68] sm:$0xf]
        %v891 = vld [vmem:[%s863 + $0x6c] sm:$0xf]
        %v892 = vld [vmem:[%s863 + $0x70] sm:$0xf]
        %v893 = vld [vmem:[%s863 + $0x74] sm:$0xf]
        %v894 = vld [vmem:[%s863 + $0x78] sm:$0xf]
        %v895 = vld [vmem:[%s863 + $0x7c] sm:$0xf]
        %v896 = vld [vmem:[%s863 + $0x80] sm:$0xf]
        %v897 = vld [vmem:[%s863 + $0x84] sm:$0xf]
        %v898 = vld [vmem:[%s863 + $0x88] sm:$0xf]
        %v899 = vld [vmem:[%s863 + $0x8c] sm:$0xf]
        %v900 = vld [vmem:[%s863 + $0x90] sm:$0xf]
        %v901 = vld [vmem:[%s863 + $0x94] sm:$0xf]
        %v902 = vld [vmem:[%s863 + $0x98] sm:$0xf]
        %v903 = vld [vmem:[%s863 + $0x9c] sm:$0xf]
        %v904 = vld [vmem:[%s863 + $0xa0] sm:$0xf]
        %v905 = vld [vmem:[%s863 + $0xa4] sm:$0xf]
        %v906 = vld [vmem:[%s863 + $0xa8] sm:$0xf]
        %v907 = vld [vmem:[%s863 + $0xac] sm:$0xf]
        %v908 = vld [vmem:[%s863 + $0xb0] sm:$0xf]
        %v909 = vld [vmem:[%s863 + $0xb4] sm:$0xf]
        %v910 = vld [vmem:[%s863 + $0xb8] sm:$0xf]
        %v911 = vld [vmem:[%s863 + $0xbc] sm:$0xf]
        %v912 = vpack.c.b16 %v661, %v659
        %v913 = vpack.c.b16 %v801, %v799
        %v914 = vpack.c.b16 %v802, %v800
        %v915 = vpack.c.b16 %v665, %v663
        %v916 = vpack.c.b16 %v805, %v803
        %v917 = vpack.c.b16 %v806, %v804
        %v918 = vpack.c.b16 %v669, %v667
        %v919 = vpack.c.b16 %v809, %v807
        %v920 = vpack.c.b16 %v810, %v808
        %v921 = vpack.c.b16 %v673, %v671
        %v922 = vpack.c.b16 %v861, %v811
        %v923 = vpack.c.b16 %v862, %v812
        %v984 = vunpack.c.l.b16 %v864
        %v985 = vunpack.c.l.b16 %v865
        %v986 = vunpack.c.l.b16 %v866
        %v987 = vunpack.c.l.b16 %v867
        %v988 = vunpack.c.l.b16 %v868
        %v989 = vunpack.c.l.b16 %v869
        %v990 = vunpack.c.l.b16 %v870
        %v991 = vunpack.c.l.b16 %v871
        %v992 = vunpack.c.l.b16 %v872
        %v993 = vunpack.c.l.b16 %v873
        %v994 = vunpack.c.l.b16 %v874
        %v995 = vunpack.c.l.b16 %v875
        %v996 = vunpack.c.l.b16 %v876
        %v997 = vunpack.c.l.b16 %v877
        %v998 = vunpack.c.l.b16 %v878
        %v999 = vunpack.c.l.b16 %v879
        %v1000 = vunpack.c.l.b16 %v880
        %v1001 = vunpack.c.l.b16 %v881
        %v1002 = vunpack.c.l.b16 %v882
        %v1003 = vunpack.c.l.b16 %v883
        %v1004 = vunpack.c.l.b16 %v884
        %v1005 = vunpack.c.l.b16 %v885
        %v1006 = vunpack.c.l.b16 %v886
        %v1007 = vunpack.c.l.b16 %v887
        %v1008 = vunpack.c.l.b16 %v888
        %v1009 = vunpack.c.l.b16 %v889
        %v1010 = vunpack.c.l.b16 %v890
        %v1011 = vunpack.c.l.b16 %v891
        %v1012 = vunpack.c.l.b16 %v892
        %v1013 = vunpack.c.l.b16 %v893
        %v1014 = vunpack.c.l.b16 %v894
        %v1015 = vunpack.c.l.b16 %v895
        %v1016 = vunpack.c.l.b16 %v896
        %v1017 = vunpack.c.l.b16 %v897
        %v1018 = vunpack.c.l.b16 %v898
        %v1019 = vunpack.c.l.b16 %v899
        %v1020 = vunpack.c.l.b16 %v900
        %v1021 = vunpack.c.l.b16 %v901
        %v1022 = vunpack.c.l.b16 %v902
        %v1023 = vunpack.c.l.b16 %v903
        %v1024 = vunpack.c.l.b16 %v904
        %v1025 = vunpack.c.l.b16 %v905
        %v1026 = vunpack.c.l.b16 %v906
        %v1027 = vunpack.c.l.b16 %v907
        %v1028 = vunpack.c.l.b16 %v908
        %v1029 = vunpack.c.l.b16 %v909
        %v1030 = vunpack.c.l.b16 %v910
        %v1031 = vunpack.c.l.b16 %v911
        %v1032 = vpack.c.b16 %v985, %v984
        %v1033 = vpack.c.b16 %v987, %v986
        %v1034 = vpack.c.b16 %v989, %v988
        %v1035 = vpack.c.b16 %v991, %v990
        %v1036 = vpack.c.b16 %v993, %v992
        %v1037 = vpack.c.b16 %v995, %v994
        %v1038 = vpack.c.b16 %v997, %v996
        %v1039 = vpack.c.b16 %v999, %v998
        %v1040 = vpack.c.b16 %v1001, %v1000
        %v1041 = vpack.c.b16 %v1003, %v1002
        %v1042 = vpack.c.b16 %v1005, %v1004
        %v1043 = vpack.c.b16 %v1007, %v1006
        %v1044 = vpack.c.b16 %v1009, %v1008
        %v1045 = vpack.c.b16 %v1011, %v1010
        %v1046 = vpack.c.b16 %v1013, %v1012
        %v1047 = vpack.c.b16 %v1015, %v1014
        %v1048 = vpack.c.b16 %v1017, %v1016
        %v1049 = vpack.c.b16 %v1019, %v1018
        %v1050 = vpack.c.b16 %v1021, %v1020
        %v1051 = vpack.c.b16 %v1023, %v1022
        %v1052 = vpack.c.b16 %v1025, %v1024
        %v1053 = vpack.c.b16 %v1027, %v1026
        %v1054 = vpack.c.b16 %v1029, %v1028
        %v1055 = vpack.c.b16 %v1031, %v1030
        %1080 = vmatprep.subr.bf16.mxu0 0
        %1081 = vmatpush1.bf16.msra.mxu0 %v1032
        %1082 = vmatprep.subr.bf16.mxu0 0
        %1083 = vmatpush1.bf16.msra.mxu0 %v1033
        %1084 = vmatprep.subr.bf16.mxu0 0
        %1085 = vmatpush1.bf16.msra.mxu0 %v1034
        %1086 = vmatprep.subr.bf16.mxu0 0
        %1087 = vmatpush1.bf16.msra.mxu0 %v1035
        %1088 = vmatprep.subr.bf16.mxu0 0
        %1089 = vmatpush1.bf16.msra.mxu0 %v1036
        %1090 = vmatprep.subr.bf16.mxu0 0
        %1091 = vmatpush1.bf16.msra.mxu0 %v1037
        %1092 = vmatprep.subr.bf16.mxu0 0
        %1093 = vmatpush1.bf16.msra.mxu0 %v1038
        %1094 = vmatprep.subr.bf16.mxu0 0
        %1095 = vmatpush1.bf16.msra.mxu0 %v1039
        %1096 = vmatprep.subr.bf16.mxu0 0
        %1097 = vmatpush1.bf16.msra.mxu0 %v1040
        %1098 = vmatprep.subr.bf16.mxu0 0
        %1099 = vmatpush1.bf16.msra.mxu0 %v1041
        %1100 = vmatprep.subr.bf16.mxu0 0
        %1101 = vmatpush1.bf16.msra.mxu0 %v1042
        %1102 = vmatprep.subr.bf16.mxu0 0
        %1103 = vmatpush1.bf16.msra.mxu0 %v1043
        %1104 = vmatprep.subr.bf16.mxu0 0
        %1105 = vmatpush1.bf16.msra.mxu0 %v1044
        %1106 = vmatprep.subr.bf16.mxu0 0
        %1107 = vmatpush1.bf16.msra.mxu0 %v1045
        %1108 = vmatprep.subr.bf16.mxu0 0
        %1109 = vmatpush1.bf16.msra.mxu0 %v1046
        %1110 = vmatprep.subr.bf16.mxu0 0
        %1111 = vmatpush1.bf16.msra.mxu0 %v1047
        %1112 = vmatprep.mubr.bf16.mxu0 %v913
        %1113 = vmatmul.mubr.bf16.gmra.mrb[0].mxu0 %v912
        %v1114 = vpop.f32.mrb[0].mxu0
        %v1115 = vadd.f32 0.0, %v1114
        %v1116 = vpop.f32.mrb[0].mxu0
        %v1117 = vpop.f32.mrb[0].mxu0
        %v1118 = vadd.f32 0.0, %v1117
        %v1119 = vpop.f32.mrb[0].mxu0
        %1120 = vmatprep.mubr.bf16.mxu0 %v916
        %1121 = vmatmul.mubr.bf16.gmra.mrb[0].mxu0 %v915
        %v1122 = vpop.f32.mrb[0].mxu0
        %v1123 = vadd.f32 0.0, %v1122
        %v1124 = vpop.f32.mrb[0].mxu0
        %v1125 = vpop.f32.mrb[0].mxu0
        %v1126 = vadd.f32 0.0, %v1125
        %v1127 = vpop.f32.mrb[0].mxu0
        %1128 = vmatprep.mubr.bf16.mxu0 %v919
        %1129 = vmatmul.mubr.bf16.gmra.mrb[0].mxu0 %v918
        %v1130 = vpop.f32.mrb[0].mxu0
        %v1131 = vadd.f32 0.0, %v1130
        %v1132 = vpop.f32.mrb[0].mxu0
        %v1133 = vpop.f32.mrb[0].mxu0
        %v1134 = vadd.f32 0.0, %v1133
        %v1135 = vpop.f32.mrb[0].mxu0
        %1136 = vmatprep.mubr.bf16.mxu0 %v922
        %1137 = vmatmul.mubr.bf16.gmra.mrb[0].mxu0 %v921
        %v1138 = vpop.f32.mrb[0].mxu0
        %v1139 = vadd.f32 0.0, %v1138
        %v1140 = vpop.f32.mrb[0].mxu0
        %v1141 = vpop.f32.mrb[0].mxu0
        %v1142 = vadd.f32 0.0, %v1141
        %v1143 = vpop.f32.mrb[0].mxu0
        %1144 = vdwg.mxu0
        %1145 = vmatprep.subr.bf16.mxu0 0
        %1146 = vmatpush1.bf16.msra.mxu0 %v1048
        %1147 = vmatprep.subr.bf16.mxu0 0
        %1148 = vmatpush1.bf16.msra.mxu0 %v1049
        %1149 = vmatprep.subr.bf16.mxu0 0
        %1150 = vmatpush1.bf16.msra.mxu0 %v1050
        %1151 = vmatprep.subr.bf16.mxu0 0
        %1152 = vmatpush1.bf16.msra.mxu0 %v1051
        %1153 = vmatprep.subr.bf16.mxu0 0
        %1154 = vmatpush1.bf16.msra.mxu0 %v1052
        %1155 = vmatprep.subr.bf16.mxu0 0
        %1156 = vmatpush1.bf16.msra.mxu0 %v1053
        %1157 = vmatprep.subr.bf16.mxu0 0
        %1158 = vmatpush1.bf16.msra.mxu0 %v1054
        %1159 = vmatprep.subr.bf16.mxu0 0
        %1160 = vmatpush1.bf16.msra.mxu0 %v1055
        %1161 = vmatprep.subr.bf16.mxu0 0
        %1162 = vmatpush1.bf16.msra.mxu0 0
        %1163 = vmatprep.subr.bf16.mxu0 0
        %1164 = vmatpush1.bf16.msra.mxu0 0
        %1165 = vmatprep.subr.bf16.mxu0 0
        %1166 = vmatpush1.bf16.msra.mxu0 0
        %1167 = vmatprep.subr.bf16.mxu0 0
        %1168 = vmatpush1.bf16.msra.mxu0 0
        %1169 = vmatprep.subr.bf16.mxu0 0
        %1170 = vmatpush1.bf16.msra.mxu0 0
        %1171 = vmatprep.subr.bf16.mxu0 0
        %1172 = vmatpush1.bf16.msra.mxu0 0
        %1173 = vmatprep.subr.bf16.mxu0 0
        %1174 = vmatpush1.bf16.msra.mxu0 0
        %1175 = vmatprep.subr.bf16.mxu0 0
        %1176 = vmatpush1.bf16.msra.mxu0 0
        %1177 = vmatprep.mubr.bf16.mxu0 0
        %1178 = vmatmul.mubr.bf16.gmra.mrb[0].mxu0 %v914
        %v1179 = vpop.f32.mrb[0].mxu0
        %v1180 = vadd.f32 %v1115, %v1179
        %v1181 = vpop.f32.mrb[0].mxu0
        %v1182 = vpop.f32.mrb[0].mxu0
        %v1183 = vadd.f32 %v1118, %v1182
        %v1184 = vpop.f32.mrb[0].mxu0
        %1185 = vmatprep.mubr.bf16.mxu0 0
        %1186 = vmatmul.mubr.bf16.gmra.mrb[0].mxu0 %v917
        %v1187 = vpop.f32.mrb[0].mxu0
        %v1188 = vadd.f32 %v1123, %v1187
        %v1189 = vpop.f32.mrb[0].mxu0
        %v1190 = vpop.f32.mrb[0].mxu0
        %v1191 = vadd.f32 %v1126, %v1190
        %v1192 = vpop.f32.mrb[0].mxu0
        %1193 = vmatprep.mubr.bf16.mxu0 0
        %1194 = vmatmul.mubr.bf16.gmra.mrb[0].mxu0 %v920
        %v1195 = vpop.f32.mrb[0].mxu0
        %v1196 = vadd.f32 %v1131, %v1195
        %v1197 = vpop.f32.mrb[0].mxu0
        %v1198 = vpop.f32.mrb[0].mxu0
        %v1199 = vadd.f32 %v1134, %v1198
        %v1200 = vpop.f32.mrb[0].mxu0
        %1201 = vmatprep.mubr.bf16.mxu0 0
        %1202 = vmatmul.mubr.bf16.gmra.mrb[0].mxu0 %v923
        %v1203 = vpop.f32.mrb[0].mxu0
        %v1204 = vadd.f32 %v1139, %v1203
        %v1205 = vpop.f32.mrb[0].mxu0
        %v1206 = vpop.f32.mrb[0].mxu0
        %v1207 = vadd.f32 %v1142, %v1206
        %v1208 = vpop.f32.mrb[0].mxu0
        %1209 = vdwg.mxu0
        %v1210 = vpack.c.b16 %v659, %v657
        %v1211 = vpack.c.b16 %v799, %v797
        %v1212 = vpack.c.b16 %v800, %v798
        %v1213 = vpack.c.b16 %v663, %v661
        %v1214 = vpack.c.b16 %v803, %v801
        %v1215 = vpack.c.b16 %v804, %v802
        %v1216 = vpack.c.b16 %v667, %v665
        %v1217 = vpack.c.b16 %v807, %v805
        %v1218 = vpack.c.b16 %v808, %v806
        %v1219 = vpack.c.b16 %v671, %v669
        %v1220 = vpack.c.b16 %v811, %v809
        %v1221 = vpack.c.b16 %v812, %v810
        %v1282 = vunpack.c.l.b16 %v813
        %v1283 = vunpack.c.l.b16 %v814
        %v1284 = vunpack.c.l.b16 %v815
        %v1285 = vunpack.c.l.b16 %v816
        %v1286 = vunpack.c.l.b16 %v817
        %v1287 = vunpack.c.l.b16 %v818
        %v1288 = vunpack.c.l.b16 %v819
        %v1289 = vunpack.c.l.b16 %v820
        %v1290 = vunpack.c.l.b16 %v821
        %v1291 = vunpack.c.l.b16 %v822
        %v1292 = vunpack.c.l.b16 %v823
        %v1293 = vunpack.c.l.b16 %v824
        %v1294 = vunpack.c.l.b16 %v825
        %v1295 = vunpack.c.l.b16 %v826
        %v1296 = vunpack.c.l.b16 %v827
        %v1297 = vunpack.c.l.b16 %v828
        %v1298 = vunpack.c.l.b16 %v829
        %v1299 = vunpack.c.l.b16 %v830
        %v1300 = vunpack.c.l.b16 %v831
        %v1301 = vunpack.c.l.b16 %v832
        %v1302 = vunpack.c.l.b16 %v833
        %v1303 = vunpack.c.l.b16 %v834
        %v1304 = vunpack.c.l.b16 %v835
        %v1305 = vunpack.c.l.b16 %v836
        %v1306 = vunpack.c.l.b16 %v837
        %v1307 = vunpack.c.l.b16 %v838
        %v1308 = vunpack.c.l.b16 %v839
        %v1309 = vunpack.c.l.b16 %v840
        %v1310 = vunpack.c.l.b16 %v841
        %v1311 = vunpack.c.l.b16 %v842
        %v1312 = vunpack.c.l.b16 %v843
        %v1313 = vunpack.c.l.b16 %v844
        %v1314 = vunpack.c.l.b16 %v845
        %v1315 = vunpack.c.l.b16 %v846
        %v1316 = vunpack.c.l.b16 %v847
        %v1317 = vunpack.c.l.b16 %v848
        %v1318 = vunpack.c.l.b16 %v849
        %v1319 = vunpack.c.l.b16 %v850
        %v1320 = vunpack.c.l.b16 %v851
        %v1321 = vunpack.c.l.b16 %v852
        %v1322 = vunpack.c.l.b16 %v853
        %v1323 = vunpack.c.l.b16 %v854
        %v1324 = vunpack.c.l.b16 %v855
        %v1325 = vunpack.c.l.b16 %v856
        %v1326 = vunpack.c.l.b16 %v857
        %v1327 = vunpack.c.l.b16 %v858
        %v1328 = vunpack.c.l.b16 %v859
        %v1329 = vunpack.c.l.b16 %v860
        %v1330 = vpack.c.b16 %v1283, %v1282
        %v1331 = vpack.c.b16 %v1285, %v1284
        %v1332 = vpack.c.b16 %v1287, %v1286
        %v1333 = vpack.c.b16 %v1289, %v1288
        %v1334 = vpack.c.b16 %v1291, %v1290
        %v1335 = vpack.c.b16 %v1293, %v1292
        %v1336 = vpack.c.b16 %v1295, %v1294
        %v1337 = vpack.c.b16 %v1297, %v1296
        %v1338 = vpack.c.b16 %v1299, %v1298
        %v1339 = vpack.c.b16 %v1301, %v1300
        %v1340 = vpack.c.b16 %v1303, %v1302
        %v1341 = vpack.c.b16 %v1305, %v1304
        %v1342 = vpack.c.b16 %v1307, %v1306
        %v1343 = vpack.c.b16 %v1309, %v1308
        %v1344 = vpack.c.b16 %v1311, %v1310
        %v1345 = vpack.c.b16 %v1313, %v1312
        %v1346 = vpack.c.b16 %v1315, %v1314
        %v1347 = vpack.c.b16 %v1317, %v1316
        %v1348 = vpack.c.b16 %v1319, %v1318
        %v1349 = vpack.c.b16 %v1321, %v1320
        %v1350 = vpack.c.b16 %v1323, %v1322
        %v1351 = vpack.c.b16 %v1325, %v1324
        %v1352 = vpack.c.b16 %v1327, %v1326
        %v1353 = vpack.c.b16 %v1329, %v1328
        %1378 = vmatprep.subr.bf16.mxu0 0
        %1379 = vmatpush1.bf16.msra.mxu0 %v1330
        %1380 = vmatprep.subr.bf16.mxu0 0
        %1381 = vmatpush1.bf16.msra.mxu0 %v1331
        %1382 = vmatprep.subr.bf16.mxu0 0
        %1383 = vmatpush1.bf16.msra.mxu0 %v1332
        %1384 = vmatprep.subr.bf16.mxu0 0
        %1385 = vmatpush1.bf16.msra.mxu0 %v1333
        %1386 = vmatprep.subr.bf16.mxu0 0
        %1387 = vmatpush1.bf16.msra.mxu0 %v1334
        %1388 = vmatprep.subr.bf16.mxu0 0
        %1389 = vmatpush1.bf16.msra.mxu0 %v1335
        %1390 = vmatprep.subr.bf16.mxu0 0
        %1391 = vmatpush1.bf16.msra.mxu0 %v1336
        %1392 = vmatprep.subr.bf16.mxu0 0
        %1393 = vmatpush1.bf16.msra.mxu0 %v1337
        %1394 = vmatprep.subr.bf16.mxu0 0
        %1395 = vmatpush1.bf16.msra.mxu0 %v1338
        %1396 = vmatprep.subr.bf16.mxu0 0
        %1397 = vmatpush1.bf16.msra.mxu0 %v1339
        %1398 = vmatprep.subr.bf16.mxu0 0
        %1399 = vmatpush1.bf16.msra.mxu0 %v1340
        %1400 = vmatprep.subr.bf16.mxu0 0
        %1401 = vmatpush1.bf16.msra.mxu0 %v1341
        %1402 = vmatprep.subr.bf16.mxu0 0
        %1403 = vmatpush1.bf16.msra.mxu0 %v1342
        %1404 = vmatprep.subr.bf16.mxu0 0
        %1405 = vmatpush1.bf16.msra.mxu0 %v1343
        %1406 = vmatprep.subr.bf16.mxu0 0
        %1407 = vmatpush1.bf16.msra.mxu0 %v1344
        %1408 = vmatprep.subr.bf16.mxu0 0
        %1409 = vmatpush1.bf16.msra.mxu0 %v1345
        %1410 = vmatprep.mubr.bf16.mxu0 %v1211
        %1411 = vmatmul.mubr.bf16.gmra.mrb[0].mxu0 %v1210
        %v1412 = vpop.f32.mrb[0].mxu0
        %v1413 = vadd.f32 %v1180, %v1412
        %v1414 = vpop.f32.mrb[0].mxu0
        %v1415 = vpop.f32.mrb[0].mxu0
        %v1416 = vadd.f32 %v1183, %v1415
        %v1417 = vpop.f32.mrb[0].mxu0
        %1418 = vmatprep.mubr.bf16.mxu0 %v1214
        %1419 = vmatmul.mubr.bf16.gmra.mrb[0].mxu0 %v1213
        %v1420 = vpop.f32.mrb[0].mxu0
        %v1421 = vadd.f32 %v1188, %v1420
        %v1422 = vpop.f32.mrb[0].mxu0
        %v1423 = vpop.f32.mrb[0].mxu0
        %v1424 = vadd.f32 %v1191, %v1423
        %v1425 = vpop.f32.mrb[0].mxu0
        %1426 = vmatprep.mubr.bf16.mxu0 %v1217
        %1427 = vmatmul.mubr.bf16.gmra.mrb[0].mxu0 %v1216
        %v1428 = vpop.f32.mrb[0].mxu0
        %v1429 = vadd.f32 %v1196, %v1428
        %v1430 = vpop.f32.mrb[0].mxu0
        %v1431 = vpop.f32.mrb[0].mxu0
        %v1432 = vadd.f32 %v1199, %v1431
        %v1433 = vpop.f32.mrb[0].mxu0
        %1434 = vmatprep.mubr.bf16.mxu0 %v1220
        %1435 = vmatmul.mubr.bf16.gmra.mrb[0].mxu0 %v1219
        %v1436 = vpop.f32.mrb[0].mxu0
        %v1437 = vadd.f32 %v1204, %v1436
        %v1438 = vpop.f32.mrb[0].mxu0
        %v1439 = vpop.f32.mrb[0].mxu0
        %v1440 = vadd.f32 %v1207, %v1439
        %v1441 = vpop.f32.mrb[0].mxu0
        %1442 = vdwg.mxu0
        %1443 = vmatprep.subr.bf16.mxu0 0
        %1444 = vmatpush1.bf16.msra.mxu0 %v1346
        %1445 = vmatprep.subr.bf16.mxu0 0
        %1446 = vmatpush1.bf16.msra.mxu0 %v1347
        %1447 = vmatprep.subr.bf16.mxu0 0
        %1448 = vmatpush1.bf16.msra.mxu0 %v1348
        %1449 = vmatprep.subr.bf16.mxu0 0
        %1450 = vmatpush1.bf16.msra.mxu0 %v1349
        %1451 = vmatprep.subr.bf16.mxu0 0
        %1452 = vmatpush1.bf16.msra.mxu0 %v1350
        %1453 = vmatprep.subr.bf16.mxu0 0
        %1454 = vmatpush1.bf16.msra.mxu0 %v1351
        %1455 = vmatprep.subr.bf16.mxu0 0
        %1456 = vmatpush1.bf16.msra.mxu0 %v1352
        %1457 = vmatprep.subr.bf16.mxu0 0
        %1458 = vmatpush1.bf16.msra.mxu0 %v1353
        %1459 = vmatprep.subr.bf16.mxu0 0
        %1460 = vmatpush1.bf16.msra.mxu0 0
        %1461 = vmatprep.subr.bf16.mxu0 0
        %1462 = vmatpush1.bf16.msra.mxu0 0
        %1463 = vmatprep.subr.bf16.mxu0 0
        %1464 = vmatpush1.bf16.msra.mxu0 0
        %1465 = vmatprep.subr.bf16.mxu0 0
        %1466 = vmatpush1.bf16.msra.mxu0 0
        %1467 = vmatprep.subr.bf16.mxu0 0
        %1468 = vmatpush1.bf16.msra.mxu0 0
        %1469 = vmatprep.subr.bf16.mxu0 0
        %1470 = vmatpush1.bf16.msra.mxu0 0
        %1471 = vmatprep.subr.bf16.mxu0 0
        %1472 = vmatpush1.bf16.msra.mxu0 0
        %1473 = vmatprep.subr.bf16.mxu0 0
        %1474 = vmatpush1.bf16.msra.mxu0 0
        %1475 = vmatprep.mubr.bf16.mxu0 0
        %1476 = vmatmul.mubr.bf16.gmra.mrb[0].mxu0 %v1212
        %v1477 = vpop.f32.mrb[0].mxu0
        %v1478 = vadd.f32 %v1413, %v1477
        %v1479 = vpop.f32.mrb[0].mxu0
        %v1480 = vpop.f32.mrb[0].mxu0
        %v1481 = vadd.f32 %v1416, %v1480
        %v1482 = vpop.f32.mrb[0].mxu0
        %1483 = vmatprep.mubr.bf16.mxu0 0
        %1484 = vmatmul.mubr.bf16.gmra.mrb[0].mxu0 %v1215
        %v1485 = vpop.f32.mrb[0].mxu0
        %v1486 = vadd.f32 %v1421, %v1485
        %v1487 = vpop.f32.mrb[0].mxu0
        %v1488 = vpop.f32.mrb[0].mxu0
        %v1489 = vadd.f32 %v1424, %v1488
        %v1490 = vpop.f32.mrb[0].mxu0
        %1491 = vmatprep.mubr.bf16.mxu0 0
        %1492 = vmatmul.mubr.bf16.gmra.mrb[0].mxu0 %v1218
        %v1493 = vpop.f32.mrb[0].mxu0
        %v1494 = vadd.f32 %v1429, %v1493
        %v1495 = vpop.f32.mrb[0].mxu0
        %v1496 = vpop.f32.mrb[0].mxu0
        %v1497 = vadd.f32 %v1432, %v1496
        %v1498 = vpop.f32.mrb[0].mxu0
        %1499 = vmatprep.mubr.bf16.mxu0 0
        %1500 = vmatmul.mubr.bf16.gmra.mrb[0].mxu0 %v1221
        %v1501 = vpop.f32.mrb[0].mxu0
        %v1502 = vadd.f32 %v1437, %v1501
        %v1503 = vpop.f32.mrb[0].mxu0
        %v1504 = vpop.f32.mrb[0].mxu0
        %v1505 = vadd.f32 %v1440, %v1504
        %v1506 = vpop.f32.mrb[0].mxu0
        %1507 = vdwg.mxu0
        %v1508 = vunpack.c.l.b16 %v756
        %v1509 = vunpack.c.l.b16 %v796
        %s1510 = scalar_lea.vmem %s3, 384
        %v1511 = vld [vmem:[%s1510] sm:$0xf]
        %v1512 = vld [vmem:[%s1510 + $0x4] sm:$0xf]
        %v1513 = vld [vmem:[%s1510 + $0x8] sm:$0xf]
        %v1514 = vld [vmem:[%s1510 + $0xc] sm:$0xf]
        %v1515 = vld [vmem:[%s1510 + $0x10] sm:$0xf]
        %v1516 = vld [vmem:[%s1510 + $0x14] sm:$0xf]
        %v1517 = vld [vmem:[%s1510 + $0x18] sm:$0xf]
        %v1518 = vld [vmem:[%s1510 + $0x1c] sm:$0xf]
        %v1519 = vld [vmem:[%s1510 + $0x20] sm:$0xf]
        %v1520 = vld [vmem:[%s1510 + $0x24] sm:$0xf]
        %v1521 = vld [vmem:[%s1510 + $0x28] sm:$0xf]
        %v1522 = vld [vmem:[%s1510 + $0x2c] sm:$0xf]
        %v1523 = vld [vmem:[%s1510 + $0x30] sm:$0xf]
        %v1524 = vld [vmem:[%s1510 + $0x34] sm:$0xf]
        %v1525 = vld [vmem:[%s1510 + $0x38] sm:$0xf]
        %v1526 = vld [vmem:[%s1510 + $0x3c] sm:$0xf]
        %v1527 = vld [vmem:[%s1510 + $0x40] sm:$0xf]
        %v1528 = vld [vmem:[%s1510 + $0x44] sm:$0xf]
        %v1529 = vld [vmem:[%s1510 + $0x48] sm:$0xf]
        %v1530 = vld [vmem:[%s1510 + $0x4c] sm:$0xf]
        %v1531 = vld [vmem:[%s1510 + $0x50] sm:$0xf]
        %v1532 = vld [vmem:[%s1510 + $0x54] sm:$0xf]
        %v1533 = vld [vmem:[%s1510 + $0x58] sm:$0xf]
        %v1534 = vld [vmem:[%s1510 + $0x5c] sm:$0xf]
        %v1535 = vld [vmem:[%s1510 + $0x60] sm:$0xf]
        %v1536 = vld [vmem:[%s1510 + $0x64] sm:$0xf]
        %v1537 = vld [vmem:[%s1510 + $0x68] sm:$0xf]
        %v1538 = vld [vmem:[%s1510 + $0x6c] sm:$0xf]
        %v1539 = vld [vmem:[%s1510 + $0x70] sm:$0xf]
        %v1540 = vld [vmem:[%s1510 + $0x74] sm:$0xf]
        %v1541 = vld [vmem:[%s1510 + $0x78] sm:$0xf]
        %v1542 = vld [vmem:[%s1510 + $0x7c] sm:$0xf]
        %v1543 = vld [vmem:[%s1510 + $0x80] sm:$0xf]
        %v1544 = vld [vmem:[%s1510 + $0x84] sm:$0xf]
        %v1545 = vld [vmem:[%s1510 + $0x88] sm:$0xf]
        %v1546 = vld [vmem:[%s1510 + $0x8c] sm:$0xf]
        %v1547 = vld [vmem:[%s1510 + $0x90] sm:$0xf]
        %v1548 = vld [vmem:[%s1510 + $0x94] sm:$0xf]
        %v1549 = vld [vmem:[%s1510 + $0x98] sm:$0xf]
        %v1550 = vld [vmem:[%s1510 + $0x9c] sm:$0xf]
        %v1551 = vld [vmem:[%s1510 + $0xa0] sm:$0xf]
        %v1552 = vld [vmem:[%s1510 + $0xa4] sm:$0xf]
        %v1553 = vld [vmem:[%s1510 + $0xa8] sm:$0xf]
        %v1554 = vld [vmem:[%s1510 + $0xac] sm:$0xf]
        %v1555 = vld [vmem:[%s1510 + $0xb0] sm:$0xf]
        %v1556 = vld [vmem:[%s1510 + $0xb4] sm:$0xf]
        %v1557 = vld [vmem:[%s1510 + $0xb8] sm:$0xf]
        %v1558 = vld [vmem:[%s1510 + $0xbc] sm:$0xf]
        %v1559 = vpack.c.b16 %v675, %v673
        %v1560 = vpack.c.b16 %v1508, %v861
        %v1561 = vpack.c.b16 %v1509, %v862
        %v1613 = vunpack.c.l.b16 %v1511
        %v1614 = vunpack.c.l.b16 %v1512
        %v1615 = vunpack.c.l.b16 %v1513
        %v1616 = vunpack.c.l.b16 %v1514
        %v1617 = vunpack.c.l.b16 %v1515
        %v1618 = vunpack.c.l.b16 %v1516
        %v1619 = vunpack.c.l.b16 %v1517
        %v1620 = vunpack.c.l.b16 %v1518
        %v1621 = vunpack.c.l.b16 %v1519
        %v1622 = vunpack.c.l.b16 %v1520
        %v1623 = vunpack.c.l.b16 %v1521
        %v1624 = vunpack.c.l.b16 %v1522
        %v1625 = vunpack.c.l.b16 %v1523
        %v1626 = vunpack.c.l.b16 %v1524
        %v1627 = vunpack.c.l.b16 %v1525
        %v1628 = vunpack.c.l.b16 %v1526
        %v1629 = vunpack.c.l.b16 %v1527
        %v1630 = vunpack.c.l.b16 %v1528
        %v1631 = vunpack.c.l.b16 %v1529
        %v1632 = vunpack.c.l.b16 %v1530
        %v1633 = vunpack.c.l.b16 %v1531
        %v1634 = vunpack.c.l.b16 %v1532
        %v1635 = vunpack.c.l.b16 %v1533
        %v1636 = vunpack.c.l.b16 %v1534
        %v1637 = vunpack.c.l.b16 %v1535
        %v1638 = vunpack.c.l.b16 %v1536
        %v1639 = vunpack.c.l.b16 %v1537
        %v1640 = vunpack.c.l.b16 %v1538
        %v1641 = vunpack.c.l.b16 %v1539
        %v1642 = vunpack.c.l.b16 %v1540
        %v1643 = vunpack.c.l.b16 %v1541
        %v1644 = vunpack.c.l.b16 %v1542
        %v1645 = vunpack.c.l.b16 %v1543
        %v1646 = vunpack.c.l.b16 %v1544
        %v1647 = vunpack.c.l.b16 %v1545
        %v1648 = vunpack.c.l.b16 %v1546
        %v1649 = vunpack.c.l.b16 %v1547
        %v1650 = vunpack.c.l.b16 %v1548
        %v1651 = vunpack.c.l.b16 %v1549
        %v1652 = vunpack.c.l.b16 %v1550
        %v1653 = vunpack.c.l.b16 %v1551
        %v1654 = vunpack.c.l.b16 %v1552
        %v1655 = vunpack.c.l.b16 %v1553
        %v1656 = vunpack.c.l.b16 %v1554
        %v1657 = vunpack.c.l.b16 %v1555
        %v1658 = vunpack.c.l.b16 %v1556
        %v1659 = vunpack.c.l.b16 %v1557
        %v1660 = vunpack.c.l.b16 %v1558
        %v1661 = vpack.c.b16 %v1614, %v1613
        %v1662 = vpack.c.b16 %v1616, %v1615
        %v1663 = vpack.c.b16 %v1618, %v1617
        %v1664 = vpack.c.b16 %v1620, %v1619
        %v1665 = vpack.c.b16 %v1622, %v1621
        %v1666 = vpack.c.b16 %v1624, %v1623
        %v1667 = vpack.c.b16 %v1626, %v1625
        %v1668 = vpack.c.b16 %v1628, %v1627
        %v1669 = vpack.c.b16 %v1630, %v1629
        %v1670 = vpack.c.b16 %v1632, %v1631
        %v1671 = vpack.c.b16 %v1634, %v1633
        %v1672 = vpack.c.b16 %v1636, %v1635
        %v1673 = vpack.c.b16 %v1638, %v1637
        %v1674 = vpack.c.b16 %v1640, %v1639
        %v1675 = vpack.c.b16 %v1642, %v1641
        %v1676 = vpack.c.b16 %v1644, %v1643
        %v1677 = vpack.c.b16 %v1646, %v1645
        %v1678 = vpack.c.b16 %v1648, %v1647
        %v1679 = vpack.c.b16 %v1650, %v1649
        %v1680 = vpack.c.b16 %v1652, %v1651
        %v1681 = vpack.c.b16 %v1654, %v1653
        %v1682 = vpack.c.b16 %v1656, %v1655
        %v1683 = vpack.c.b16 %v1658, %v1657
        %v1684 = vpack.c.b16 %v1660, %v1659
        %1709 = vmatprep.subr.bf16.mxu0 0
        %1710 = vmatpush1.bf16.msra.mxu0 %v1661
        %1711 = vmatprep.subr.bf16.mxu0 0
        %1712 = vmatpush1.bf16.msra.mxu0 %v1662
        %1713 = vmatprep.subr.bf16.mxu0 0
        %1714 = vmatpush1.bf16.msra.mxu0 %v1663
        %1715 = vmatprep.subr.bf16.mxu0 0
        %1716 = vmatpush1.bf16.msra.mxu0 %v1664
        %1717 = vmatprep.subr.bf16.mxu0 0
        %1718 = vmatpush1.bf16.msra.mxu0 %v1665
        %1719 = vmatprep.subr.bf16.mxu0 0
        %1720 = vmatpush1.bf16.msra.mxu0 %v1666
        %1721 = vmatprep.subr.bf16.mxu0 0
        %1722 = vmatpush1.bf16.msra.mxu0 %v1667
        %1723 = vmatprep.subr.bf16.mxu0 0
        %1724 = vmatpush1.bf16.msra.mxu0 %v1668
        %1725 = vmatprep.subr.bf16.mxu0 0
        %1726 = vmatpush1.bf16.msra.mxu0 %v1669
        %1727 = vmatprep.subr.bf16.mxu0 0
        %1728 = vmatpush1.bf16.msra.mxu0 %v1670
        %1729 = vmatprep.subr.bf16.mxu0 0
        %1730 = vmatpush1.bf16.msra.mxu0 %v1671
        %1731 = vmatprep.subr.bf16.mxu0 0
        %1732 = vmatpush1.bf16.msra.mxu0 %v1672
        %1733 = vmatprep.subr.bf16.mxu0 0
        %1734 = vmatpush1.bf16.msra.mxu0 %v1673
        %1735 = vmatprep.subr.bf16.mxu0 0
        %1736 = vmatpush1.bf16.msra.mxu0 %v1674
        %1737 = vmatprep.subr.bf16.mxu0 0
        %1738 = vmatpush1.bf16.msra.mxu0 %v1675
        %1739 = vmatprep.subr.bf16.mxu0 0
        %1740 = vmatpush1.bf16.msra.mxu0 %v1676
        %1741 = vmatprep.mubr.bf16.mxu0 %v1214
        %1742 = vmatmul.mubr.bf16.gmra.mrb[0].mxu0 %v1213
        %v1743 = vpop.f32.mrb[0].mxu0
        %v1744 = vadd.f32 0.0, %v1743
        %v1745 = vpop.f32.mrb[0].mxu0
        %v1746 = vpop.f32.mrb[0].mxu0
        %v1747 = vadd.f32 0.0, %v1746
        %v1748 = vpop.f32.mrb[0].mxu0
        %1749 = vmatprep.mubr.bf16.mxu0 %v1217
        %1750 = vmatmul.mubr.bf16.gmra.mrb[0].mxu0 %v1216
        %v1751 = vpop.f32.mrb[0].mxu0
        %v1752 = vadd.f32 0.0, %v1751
        %v1753 = vpop.f32.mrb[0].mxu0
        %v1754 = vpop.f32.mrb[0].mxu0
        %v1755 = vadd.f32 0.0, %v1754
        %v1756 = vpop.f32.mrb[0].mxu0
        %1757 = vmatprep.mubr.bf16.mxu0 %v1220
        %1758 = vmatmul.mubr.bf16.gmra.mrb[0].mxu0 %v1219
        %v1759 = vpop.f32.mrb[0].mxu0
        %v1760 = vadd.f32 0.0, %v1759
        %v1761 = vpop.f32.mrb[0].mxu0
        %v1762 = vpop.f32.mrb[0].mxu0
        %v1763 = vadd.f32 0.0, %v1762
        %v1764 = vpop.f32.mrb[0].mxu0
        %1765 = vmatprep.mubr.bf16.mxu0 %v1560
        %1766 = vmatmul.mubr.bf16.gmra.mrb[0].mxu0 %v1559
        %v1767 = vpop.f32.mrb[0].mxu0
        %v1768 = vadd.f32 0.0, %v1767
        %v1769 = vpop.f32.mrb[0].mxu0
        %v1770 = vpop.f32.mrb[0].mxu0
        %v1771 = vadd.f32 0.0, %v1770
        %v1772 = vpop.f32.mrb[0].mxu0
        %1773 = vdwg.mxu0
        %1774 = vmatprep.subr.bf16.mxu0 0
        %1775 = vmatpush1.bf16.msra.mxu0 %v1677
        %1776 = vmatprep.subr.bf16.mxu0 0
        %1777 = vmatpush1.bf16.msra.mxu0 %v1678
        %1778 = vmatprep.subr.bf16.mxu0 0
        %1779 = vmatpush1.bf16.msra.mxu0 %v1679
        %1780 = vmatprep.subr.bf16.mxu0 0
        %1781 = vmatpush1.bf16.msra.mxu0 %v1680
        %1782 = vmatprep.subr.bf16.mxu0 0
        %1783 = vmatpush1.bf16.msra.mxu0 %v1681
        %1784 = vmatprep.subr.bf16.mxu0 0
        %1785 = vmatpush1.bf16.msra.mxu0 %v1682
        %1786 = vmatprep.subr.bf16.mxu0 0
        %1787 = vmatpush1.bf16.msra.mxu0 %v1683
        %1788 = vmatprep.subr.bf16.mxu0 0
        %1789 = vmatpush1.bf16.msra.mxu0 %v1684
        %1790 = vmatprep.subr.bf16.mxu0 0
        %1791 = vmatpush1.bf16.msra.mxu0 0
        %1792 = vmatprep.subr.bf16.mxu0 0
        %1793 = vmatpush1.bf16.msra.mxu0 0
        %1794 = vmatprep.subr.bf16.mxu0 0
        %1795 = vmatpush1.bf16.msra.mxu0 0
        %1796 = vmatprep.subr.bf16.mxu0 0
        %1797 = vmatpush1.bf16.msra.mxu0 0
        %1798 = vmatprep.subr.bf16.mxu0 0
        %1799 = vmatpush1.bf16.msra.mxu0 0
        %1800 = vmatprep.subr.bf16.mxu0 0
        %1801 = vmatpush1.bf16.msra.mxu0 0
        %1802 = vmatprep.subr.bf16.mxu0 0
        %1803 = vmatpush1.bf16.msra.mxu0 0
        %1804 = vmatprep.subr.bf16.mxu0 0
        %1805 = vmatpush1.bf16.msra.mxu0 0
        %1806 = vmatprep.mubr.bf16.mxu0 0
        %1807 = vmatmul.mubr.bf16.gmra.mrb[0].mxu0 %v1215
        %v1808 = vpop.f32.mrb[0].mxu0
        %v1809 = vadd.f32 %v1744, %v1808
        %v1810 = vpop.f32.mrb[0].mxu0
        %v1811 = vpop.f32.mrb[0].mxu0
        %v1812 = vadd.f32 %v1747, %v1811
        %v1813 = vpop.f32.mrb[0].mxu0
        %1814 = vmatprep.mubr.bf16.mxu0 0
        %1815 = vmatmul.mubr.bf16.gmra.mrb[0].mxu0 %v1218
        %v1816 = vpop.f32.mrb[0].mxu0
        %v1817 = vadd.f32 %v1752, %v1816
        %v1818 = vpop.f32.mrb[0].mxu0
        %v1819 = vpop.f32.mrb[0].mxu0
        %v1820 = vadd.f32 %v1755, %v1819
        %v1821 = vpop.f32.mrb[0].mxu0
        %1822 = vmatprep.mubr.bf16.mxu0 0
        %1823 = vmatmul.mubr.bf16.gmra.mrb[0].mxu0 %v1221
        %v1824 = vpop.f32.mrb[0].mxu0
        %v1825 = vadd.f32 %v1760, %v1824
        %v1826 = vpop.f32.mrb[0].mxu0
        %v1827 = vpop.f32.mrb[0].mxu0
        %v1828 = vadd.f32 %v1763, %v1827
        %v1829 = vpop.f32.mrb[0].mxu0
        %1830 = vmatprep.mubr.bf16.mxu0 0
        %1831 = vmatmul.mubr.bf16.gmra.mrb[0].mxu0 %v1561
        %v1832 = vpop.f32.mrb[0].mxu0
        %v1833 = vadd.f32 %v1768, %v1832
        %v1834 = vpop.f32.mrb[0].mxu0
        %v1835 = vpop.f32.mrb[0].mxu0
        %v1836 = vadd.f32 %v1771, %v1835
        %v1837 = vpop.f32.mrb[0].mxu0
        %1838 = vdwg.mxu0
        %v1839 = vadd.f32 %v1478, %v1809
        %v1840 = vadd.f32 %v1481, %v1812
        %v1841 = vadd.f32 %v1486, %v1817
        %v1842 = vadd.f32 %v1489, %v1820
        %v1843 = vadd.f32 %v1494, %v1825
        %v1844 = vadd.f32 %v1497, %v1828
        %v1845 = vadd.f32 %v1502, %v1833
        %v1846 = vadd.f32 %v1505, %v1836
        %v1847 = vlaneseq
        %v1848 = vshrl.u32 %v1847, 7
        %v1849 = vsub.s32 0, %v1848
        %v1850 = vrot.slane %v199, %v1849
        %v1851 = vadd.f32 %v1839, %v1850
        %v1852 = vadd.f32 %v1840, %v1850
        %v1853 = vadd.f32 %v1841, %v1850
        %v1854 = vadd.f32 %v1842, %v1850
        %v1855 = vadd.f32 %v1843, %v1850
        %v1856 = vadd.f32 %v1844, %v1850
        %v1857 = vadd.f32 %v1845, %v1850
        %v1858 = vadd.f32 %v1846, %v1850
        %vm1859 = vcmp.ge.f32.partialorder %v1851, 0.0
        %vm1860 = vcmp.ge.f32.partialorder %v1852, 0.0
        %vm1861 = vcmp.ge.f32.partialorder %v1853, 0.0
        %vm1862 = vcmp.ge.f32.partialorder %v1854, 0.0
        %vm1863 = vcmp.ge.f32.partialorder %v1855, 0.0
        %vm1864 = vcmp.ge.f32.partialorder %v1856, 0.0
        %vm1865 = vcmp.ge.f32.partialorder %v1857, 0.0
        %vm1866 = vcmp.ge.f32.partialorder %v1858, 0.0
        %v1867 = vlaneseq
        %v1868 = vshrl.u32 %v1867, 7
        %v1869 = vsub.s32 0, %v1868
        %v1870 = vrot.slane %v200, %v1869
        %v1871 = vmul.f32 %v1870, %v1851
        %v1872 = vmul.f32 %v1870, %v1852
        %v1873 = vmul.f32 %v1870, %v1853
        %v1874 = vmul.f32 %v1870, %v1854
        %v1875 = vmul.f32 %v1870, %v1855
        %v1876 = vmul.f32 %v1870, %v1856
        %v1877 = vmul.f32 %v1870, %v1857
        %v1878 = vmul.f32 %v1870, %v1858
        %v1879 = vsel %vm1859, %v1851, %v1871
        %v1880 = vsel %vm1860, %v1852, %v1872
        %v1881 = vsel %vm1861, %v1853, %v1873
        %v1882 = vsel %vm1862, %v1854, %v1874
        %v1883 = vsel %vm1863, %v1855, %v1875
        %v1884 = vsel %vm1864, %v1856, %v1876
        %v1885 = vsel %vm1865, %v1857, %v1877
        %v1886 = vsel %vm1866, %v1858, %v1878
        %1887 = vst [vmem:[%s190] sm:$0xff] %v1879
        %1888 = vst [vmem:[%s190 + $0x8] sm:$0xff] %v1880
        %1889 = vst [vmem:[%s190 + $0x10] sm:$0xff] %v1881
        %1890 = vst [vmem:[%s190 + $0x18] sm:$0xff] %v1882
        %1891 = vst [vmem:[%s190 + $0x20] sm:$0xff] %v1883
        %1892 = vst [vmem:[%s190 + $0x28] sm:$0xff] %v1884
        %1893 = vst [vmem:[%s190 + $0x30] sm:$0xff] %v1885
        %1894 = vst [vmem:[%s190 + $0x38] sm:$0xff] %v1886
        %s1895 = sand.u32 %s115, 1
        %s1896 = scalar_lea.sflag [#allocation4], %s1895
        %s1897 = sand.u32 %s115, 1
        %s1898 = smul.addr %s1897, 64
        %s1899 = scalar_lea.vmem [#allocation3], %s1898
        // Predicated region
        $region37: #{conv2_forward.1} parent=35 // pred_check
          %p1900 = pneg %p125
        $region38: #{conv2_forward.1} parent=35 // pred_check_branch
          %1902 = sbr.rel (%p1900) target = $region40
        $region39: #{conv2_forward.1} parent=35 // pred_region
          %s1904 = ssub.s32 1024, 1024
          %1905 = vsyncadd %s1896, %s1904
          %s1906 = smul.addr %s18, 8
          %s1907 = smul.addr %s1906, 128
          %s1908 = scalar_lea.hbm %s4, %s1907
          %s1909 = sshll.u32 %s1899, 4
          %s1910 = int_to_ptr.vmem [resolvable:$true] %s1909
          %1915 = dma.vmem_to_hbm [thread:$0]  %s1910, 1024, %s1908, %s1896, 128, 128, 8
        $region40: #{conv2_forward.1} parent=35 // pred_fallthru
          _
      $region36: #{conv2_forward.1} parent=5 // pred_fallthru
        _
      %p1916 = scmp.le.s32.totalorder 2, %s13
      // Predicated region
      $region41: #{conv2_forward.1} parent=5 // pred_check
        %p1917 = pneg %p1916
      $region42: #{conv2_forward.1} parent=5 // pred_check_branch
        %1919 = sbr.rel (%p1917) target = $region44
      $region43: #{conv2_forward.1} parent=5 // pred_region
        %s1920 = ssub.s32 %s13, 2
        // Predicated region
        $region45: #{conv2_forward.1} parent=43 // pred_check
          %p1921 = pneg %p131
        $region46: #{conv2_forward.1} parent=43 // pred_check_branch
          %1923 = sbr.rel (%p1921) target = $region48
        $region47: #{conv2_forward.1} parent=43 // pred_region
          %s1924 = sand.u32 %s116, 1
          %s1925 = scalar_lea.sflag [#allocation4], %s1924
          %s1926 = sand.u32 %s116, 1
          %s1927 = smul.addr %s1926, 64
          %s1928 = scalar_lea.vmem [#allocation3], %s1927
          %1929 = dma.done %s1925, 1024
        $region48: #{conv2_forward.1} parent=43 // pred_fallthru
          _
      $region44: #{conv2_forward.1} parent=5 // pred_fallthru
        _
    $region6: #{conv2_forward.1} parent=1 // loop_footer
      %s17 = sadd.s32 1, %s13
    $region7: #{conv2_forward.1} parent=1 // loop_footer_branch
      %12 = sbr.rel target = $region3
    $region8: #{conv2_forward.1} parent=1 // loop_exit
      _
    %1930 = vsyncpa [#allocation4], 1
    %s1931 = scalar_lea.sflag [#allocation4], 1
    %1932 = vsyncpa %s1931, 1

</llo_original>
